<compile_context>
chip_gen: v7x
topology: tpu7x:2x2x1
jax: 0.10.0
libtpu: 0.0.40
codegen_flags: <defaults>
</compile_context>

<pallas_src>
import jax
import jax.numpy as jnp
from jax.experimental import pallas as pl
from jax.experimental.pallas import tpu as pltpu

EPS = float(jnp.finfo(jnp.float32).eps)  # == torch.finfo(torch.float32).eps


def _row_tile(n, cap=256):
    """Largest divisor of n (pref. multiple of 16, else 8) that is <= cap."""
    if n <= cap:
        return n
    best = 0
    for t in range(16, cap + 1, 16):
        if n % t == 0:
            best = t
    if best == 0:
        for t in range(8, cap + 1, 8):
            if n % t == 0:
                best = t
    if best == 0:
        # TODO(synk): N with no multiple-of-8 divisor <= cap needs padding /
        # remainder handling; falling back to one full-width row block.
        best = n
    return best


# ------------------------- fused SuperNet kernel ----------------------------
def _make_supernet_kernel(tm, n_blocks):
    """tm / n_blocks are static row-block parameters for the A construction."""

    def kernel(sc_ref, locs_ref, locst_ref, it_ref, i_ref,
               btx_ref, kk_ref, v0_ref, v_ref, a_scr, dvec_scr):
        # sc_ref  : SMEM (4,) = [l1, l2*N, 1/(s1^2+eps), 4/(s2^2+eps)]
        # locs_ref: (N, 2)   locst_ref: (2, N)   it_ref: (N, C)   i_ref: (C, N)
        # btx_ref : (K, N) = B^T X     kk_ref: (K, K) = B^T B + 2 l3 W^T W
        # v0_ref  : (K, N) initial V   v_ref : (K, N) output, carried resident
        # a_scr   : (N, N) bf16 affinity (single buffer, built once)
        # dvec_scr: (1, N) f32 diag(D), lane-dense
        layer = pl.program_id(0)
        f32 = jnp.float32
        n_pix = a_scr.shape[1]

        @pl.when(layer == 0)
        def _setup():
            inv1 = sc_ref[2]        # 1 / (sigma1^2 + eps)
            inv2z = sc_ref[3]       # 4 / (sigma2^2 + eps)   (z^2 == 4*(1-same))
            dacc = jnp.zeros((1, n_pix), f32)
            for blk in range(n_blocks):                 # static row-block loop
                r0 = blk * tm
                lrow = locs_ref[r0:r0 + tm, :]          # (tm, 2)
                dx = lrow[:, 0:1] - locst_ref[0:1, :]   # (tm, N)
                dy = lrow[:, 1:2] - locst_ref[1:2, :]
                t_dis = dx * dx + dy * dy               # |d|^2
                # one-hot identity: same = I^T I in {0,1}; z^2 = 4*(1-same)
                same = jnp.dot(it_ref[r0:r0 + tm, :], i_ref[...],
                               preferred_element_type=f32)          # (tm, N)
                a_blk = jnp.exp(-(t_dis * inv1 + (1.0 - same) * inv2z))
                a_scr[r0:r0 + tm, :] = a_blk.astype(a_scr.dtype)    # bf16 A
                # A symmetric -> column sums (accumulated) == row sums = diag(D)
                dacc = dacc + jnp.sum(a_blk, axis=0, keepdims=True)
            dvec_scr[...] = dacc
            v_ref[...] = v0_ref[...]                    # init carried V

        l1 = sc_ref[0]
        l2n = sc_ref[1]                                 # lambda2 * N

        v = v_ref[...]                                              # (K, N) f32
        # V @ A on the bf16 MXU path, f32 accumulation (A is symmetric).
        va = jnp.dot(v.astype(a_scr.dtype), a_scr[...],
                     preferred_element_type=f32)                    # (K, N)

        # numerator^T  = B^T X + l1 * V A + l2 * N
        num = btx_ref[...] + l1 * va + l2n
        # denominator^T = (B^T B + 2 l3 W^T W) V + l1 * diag(D) * V
        #               + l2 * N * colsum_K(V) + eps
        colsum = jnp.sum(v, axis=0, keepdims=True)                  # (1, N)
        den = (jnp.dot(kk_ref[...], v, preferred_element_type=f32)
               + l1 * (dvec_scr[...] * v)
               + l2n * colsum
               + EPS)

        v_new = v * (num / den)
        v_new = jnp.where(v_new < 0.001, 0.0, v_new)                # threshold
        v_new = v_new / jnp.sum(v_new, axis=0, keepdims=True)       # col norm
        v_ref[...] = v_new                              # stays resident in VMEM

    return kernel


# -------------------------------- wrapper ------------------------------------
def super_net_forward(x, v, locs, b_mat, i_mat, params, n_layers):
    """Returns (V, W) with V:(K, N), W:(N, K) — same as the PyTorch module."""
    f32 = jnp.float32
    d_feat, n_pix = x.shape
    k = b_mat.shape[1]
    c_cls = i_mat.shape[0]

    # --- JAX glue: parameter normalization + argmax-based W row gather -------
    w1 = jnp.abs(params["W_1"]) / jnp.sum(jnp.abs(params["W_1"]))
    w2 = jnp.abs(params["W_2"]) / jnp.sum(jnp.abs(params["W_2"]))
    w3 = jnp.abs(params["W_3"]) / jnp.sum(jnp.abs(params["W_3"]))
    stack = jnp.concatenate([w1, w2, w3], axis=0)          # (3, K)
    idx = jnp.argmax(i_mat.T, axis=1)                      # (N,)
    w_sel = jnp.take(stack, idx, axis=0).astype(f32)       # (N, K)

    # --- loop-invariant small matmuls hoisted out of the layer grid ---------
    xf = x.astype(f32)
    bf = b_mat.astype(f32)
    btx = jnp.dot(bf.T, xf)                                # (K, N)
    l3 = jnp.asarray(params["lambda3"], f32)
    kk = jnp.dot(bf.T, bf) + 2.0 * l3 * jnp.dot(w_sel.T, w_sel)   # (K, K)

    l1 = jnp.asarray(params["lambda1"], f32)
    l2 = jnp.asarray(params["lambda2"], f32)
    s1 = jnp.asarray(params["sigma1"], f32)
    s2 = jnp.asarray(params["sigma2"], f32)
    sc = jnp.stack([l1,
                    l2 * jnp.float32(n_pix),
                    1.0 / (s1 * s1 + EPS),
                    4.0 / (s2 * s2 + EPS)]).astype(f32)    # SMEM scalars

    locs_f = locs.astype(f32)                              # (N, 2)
    it_f = i_mat.T.astype(f32)                             # (N, C)
    i_f = i_mat.astype(f32)                                # (C, N)
    v0 = v.astype(f32)                                     # (K, N)

    tm = _row_tile(n_pix)
    n_blocks = n_pix // tm
    kernel = _make_supernet_kernel(tm, n_blocks)

    # --- generation-aware VMEM budgeting -------------------------------------
    in_bytes = 4 * (2 * n_pix + 2 * n_pix + c_cls * n_pix + c_cls * n_pix
                    + k * n_pix + k * k + k * n_pix)
    need = (2 * n_pix * n_pix            # bf16 A scratch (single buffer)
            + 4 * n_pix                  # diag(D) scratch
            + 2 * in_bytes               # double-buffered (tiny) inputs
            + 2 * 4 * k * n_pix          # output block
            + 6 * 4 * tm * n_pix         # setup temporaries
            + (2 << 20))                 # margin
    if need <= (14 << 20):               # fits v5e's 16 MiB default scoped VMEM
        vmem_limit = None
    else:
        cap = 64 << 20                   # conservative fallback (v7x per-TC VMEM)
        try:
            cap = int(getattr(pltpu.get_tpu_info(), "vmem_capacity_bytes", cap))
        except Exception:
            pass
        vmem_limit = int(min(need, (cap // 8) * 7))   # leave headroom

    v_out = pl.pallas_call(
        kernel,
        grid=(n_layers,),
        in_specs=[
            pl.BlockSpec(memory_space=pltpu.MemorySpace.SMEM),   # scalars
            pl.BlockSpec((n_pix, 2), lambda i: (0, 0)),          # locs
            pl.BlockSpec((2, n_pix), lambda i: (0, 0)),          # locs^T
            pl.BlockSpec((n_pix, c_cls), lambda i: (0, 0)),      # I^T
            pl.BlockSpec((c_cls, n_pix), lambda i: (0, 0)),      # I
            pl.BlockSpec((k, n_pix), lambda i: (0, 0)),          # B^T X
            pl.BlockSpec((k, k), lambda i: (0, 0)),              # B^T B + 2 l3 W^T W
            pl.BlockSpec((k, n_pix), lambda i: (0, 0)),          # V0
        ],
        out_specs=pl.BlockSpec((k, n_pix), lambda i: (0, 0)),    # V (resident)
        out_shape=jax.ShapeDtypeStruct((k, n_pix), f32),
        scratch_shapes=[pltpu.VMEM((n_pix, n_pix), jnp.bfloat16),
                        pltpu.VMEM((1, n_pix), f32)],
        compiler_params=pltpu.CompilerParams(
            dimension_semantics=("arbitrary",),
            vmem_limit_bytes=vmem_limit),
    )(sc, locs_f, locs_f.T, it_f, i_f, btx, kk, v0)

    return v_out, w_sel   # V:(K, N), W:(N, K)


# ------------------------ pure-JAX reference (checking) ----------------------
def ref_forward(x, v, locs, b_mat, i_mat, params, n_layers):
    w1 = jnp.abs(params["W_1"]) / jnp.sum(jnp.abs(params["W_1"]))
    w2 = jnp.abs(params["W_2"]) / jnp.sum(jnp.abs(params["W_2"]))
    w3 = jnp.abs(params["W_3"]) / jnp.sum(jnp.abs(params["W_3"]))
    stack = jnp.stack([w1, w2, w3])                        # (3, 1, K)
    w = jnp.squeeze(stack[jnp.argmax(i_mat.T, axis=1)])    # (N, K)
    l1, l2, l3 = params["lambda1"], params["lambda2"], params["lambda3"]
    s1, s2 = params["sigma1"], params["sigma2"]

    x_d = locs[:, 0][:, None] - locs[:, 0][None, :]
    y_d = locs[:, 1][:, None] - locs[:, 1][None, :]
    t_dis = jnp.abs(x_d) ** 2 + jnp.abs(y_d) ** 2
    z = jnp.sum(jnp.abs(i_mat[:, :, None] - i_mat[:, None, :]), axis=0)
    a_mat = jnp.exp(-(t_dis / (s1 ** 2 + EPS) + z ** 2 / (s2 ** 2 + EPS)))
    d_mat = jnp.diag(jnp.sum(a_mat, axis=1))

    n_pix = x.shape[1]
    k = b_mat.shape[1]
    jm = jnp.ones((n_pix, n_pix), jnp.float32)
    j = jnp.ones((k, n_pix), jnp.float32)
    e = jnp.ones((n_pix, k), jnp.float32) * EPS

    vv = v
    for _ in range(n_layers):
        num = x.T @ b_mat + l1 * (a_mat @ vv.T) + l2 * (jm @ j.T)
        den = ((vv.T @ b_mat.T) @ b_mat + l1 * (d_mat @ vv.T)
               + l2 * ((vv.T @ j) @ j.T) + e + 2 * l3 * (vv.T @ (w.T @ w)))
        delta = num / den
        vt = vv.T * delta
        vt = jnp.where(vt < 0.001, 0.0, vt)
        vv = vt.T
        vv = vv / jnp.sum(vv, axis=0)
    return vv, w


# --------------------------------- main --------------------------------------
if __name__ == "__main__":
    # 16x16 pixel grid -> N = 256 pixels; small feature/component counts.
    N_PIX, D_FEAT, K_COMP, C_CLS, N_LAYERS = 256, 8, 4, 3, 3

    key = jax.random.PRNGKey(0)
    k1, k2, k3, k4, k5 = jax.random.split(key, 5)
    x = jax.random.uniform(k1, (D_FEAT, N_PIX), jnp.float32, 0.1, 1.0)
    v = jax.random.uniform(k2, (K_COMP, N_PIX), jnp.float32, 0.1, 1.0)
    b_mat = jax.random.uniform(k3, (D_FEAT, K_COMP), jnp.float32, 0.1, 1.0)
    locs = jax.random.uniform(k4, (N_PIX, 2), jnp.float32, 0.0, 10.0)
    labels = jax.random.randint(k5, (N_PIX,), 0, C_CLS)
    i_mat = jax.nn.one_hot(labels, C_CLS, dtype=jnp.float32).T   # (C, N)

    # Deterministic parameter init matching SuperNet.__init__
    params = dict(
        lambda1=30.0, lambda2=50.0, lambda3=30.0, sigma1=5.0, sigma2=5.0,
        W_1=jnp.ones((1, K_COMP), jnp.float32) * 20.0,
        W_2=jnp.ones((1, K_COMP), jnp.float32) * 8.0,
        W_3=jnp.ones((1, K_COMP), jnp.float32) * 0.5,
    )

    v_out, w_out = super_net_forward(x, v, locs, b_mat, i_mat, params, N_LAYERS)
    v_out = jax.block_until_ready(v_out)
    w_out = jax.block_until_ready(w_out)

    v_ref, w_ref = ref_forward(x, v, locs, b_mat, i_mat, params, N_LAYERS)
    assert v_out.shape == (K_COMP, N_PIX) and w_out.shape == (N_PIX, K_COMP)
    # Slightly relaxed vs. pure-f32 tolerance because A (and the V operand of
    # V@A) are carried in bf16 on the MXU; accumulation stays f32.
    assert jnp.allclose(v_out, v_ref, rtol=2e-3, atol=2e-4), "V mismatch"
    assert jnp.allclose(w_out, w_ref, rtol=1e-5, atol=1e-6), "W mismatch"

    print("KERNEL_OK")
</pallas_src>

<mosaic_0001>
module attributes {stable_mosaic.version = 11 : i64} {
  func.func @kernel(%arg0: i32, %arg1: memref<4xf32, #tpu.memory_space<smem>>, %arg2: memref<256x2xf32, #tpu.memory_space<vmem>>, %arg3: memref<2x256xf32, #tpu.memory_space<vmem>>, %arg4: memref<256x3xf32, #tpu.memory_space<vmem>>, %arg5: memref<3x256xf32, #tpu.memory_space<vmem>>, %arg6: memref<4x256xf32, #tpu.memory_space<vmem>>, %arg7: memref<4x4xf32, #tpu.memory_space<vmem>>, %arg8: memref<4x256xf32, #tpu.memory_space<vmem>>, %arg9: memref<4x256xf32, #tpu.memory_space<vmem>>, %arg10: memref<256x256xbf16, #tpu.memory_space<vmem>>, %arg11: memref<1x256xf32, #tpu.memory_space<vmem>>) attributes {dimension_semantics = [#tpu.dimension_semantics<arbitrary>], iteration_bounds = array<i64: 3>, scalar_prefetch = 0 : i64, scratch_operands = 2 : i64, tpu.core_type = #tpu.core_type<tc>, window_params = [{transform_indices = @transform_0, window_bounds = array<i64: 4>}, {pipeline_mode = #tpu.pipeline_mode<synchronous>, transform_indices = @transform_1, window_bounds = array<i64: 256, 2>}, {pipeline_mode = #tpu.pipeline_mode<synchronous>, transform_indices = @transform_2, window_bounds = array<i64: 2, 256>}, {pipeline_mode = #tpu.pipeline_mode<synchronous>, transform_indices = @transform_3, window_bounds = array<i64: 256, 3>}, {pipeline_mode = #tpu.pipeline_mode<synchronous>, transform_indices = @transform_4, window_bounds = array<i64: 3, 256>}, {pipeline_mode = #tpu.pipeline_mode<synchronous>, transform_indices = @transform_5, window_bounds = array<i64: 4, 256>}, {pipeline_mode = #tpu.pipeline_mode<synchronous>, transform_indices = @transform_6, window_bounds = array<i64: 4, 4>}, {pipeline_mode = #tpu.pipeline_mode<synchronous>, transform_indices = @transform_7, window_bounds = array<i64: 4, 256>}, {pipeline_mode = #tpu.pipeline_mode<synchronous>, transform_indices = @transform_8, window_bounds = array<i64: 4, 256>}]} {
    %c0_i32 = arith.constant 0 : i32
    %0 = arith.cmpi eq, %arg0, %c0_i32 : i32
    %1 = arith.extui %0 : i1 to i32
    %c0_i32_0 = arith.constant 0 : i32
    %2 = arith.cmpi ne, %1, %c0_i32_0 : i32
    scf.if %2 {
      %c2 = arith.constant 2 : index
      %42 = memref.load %arg1[%c2] : memref<4xf32, #tpu.memory_space<smem>>
      %c3 = arith.constant 3 : index
      %43 = memref.load %arg1[%c3] : memref<4xf32, #tpu.memory_space<smem>>
      %cst_19 = arith.constant 0.000000e+00 : f32
      %44 = vector.broadcast %cst_19 : f32 to vector<1x256xf32>
      %c0_20 = arith.constant 0 : index
      %c0_21 = arith.constant 0 : index
      %45 = vector.load %arg2[%c0_20, %c0_21] : memref<256x2xf32, #tpu.memory_space<vmem>>, vector<256x2xf32>
      %46 = vector.extract_strided_slice %45 {offsets = [0, 0], sizes = [256, 1], strides = [1, 1]} : vector<256x2xf32> to vector<256x1xf32>
      %c0_22 = arith.constant 0 : index
      %c0_23 = arith.constant 0 : index
      %47 = vector.load %arg3[%c0_22, %c0_23] : memref<2x256xf32, #tpu.memory_space<vmem>>, vector<1x256xf32>
      %48 = vector.broadcast %46 : vector<256x1xf32> to vector<256x256xf32>
      %49 = vector.broadcast %47 : vector<1x256xf32> to vector<256x256xf32>
      %50 = arith.subf %48, %49 : vector<256x256xf32>
      %51 = vector.extract_strided_slice %45 {offsets = [0, 1], sizes = [256, 1], strides = [1, 1]} : vector<256x2xf32> to vector<256x1xf32>
      %c1_24 = arith.constant 1 : index
      %c0_25 = arith.constant 0 : index
      %52 = vector.load %arg3[%c1_24, %c0_25] : memref<2x256xf32, #tpu.memory_space<vmem>>, vector<1x256xf32>
      %53 = vector.broadcast %51 : vector<256x1xf32> to vector<256x256xf32>
      %54 = vector.broadcast %52 : vector<1x256xf32> to vector<256x256xf32>
      %55 = arith.subf %53, %54 : vector<256x256xf32>
      %56 = arith.mulf %50, %50 : vector<256x256xf32>
      %57 = arith.mulf %55, %55 : vector<256x256xf32>
      %58 = arith.addf %56, %57 : vector<256x256xf32>
      %c0_26 = arith.constant 0 : index
      %c0_27 = arith.constant 0 : index
      %59 = vector.load %arg4[%c0_26, %c0_27] : memref<256x3xf32, #tpu.memory_space<vmem>>, vector<256x3xf32>
      %c0_28 = arith.constant 0 : index
      %c0_29 = arith.constant 0 : index
      %60 = vector.load %arg5[%c0_28, %c0_29] : memref<3x256xf32, #tpu.memory_space<vmem>>, vector<3x256xf32>
      %cst_30 = arith.constant dense<0.000000e+00> : vector<256x256xf32>
      %61 = tpu.matmul %59, %60, %cst_30 {dimension_numbers = #tpu.dot_dimension_numbers<[1], [0], [0], [1], [0, 0, 1, 1], [], []>} : vector<256x3xf32>, vector<3x256xf32>, vector<256x256xf32> -> vector<256x256xf32>
      %62 = vector.broadcast %42 : f32 to vector<256x256xf32>
      %63 = arith.mulf %58, %62 : vector<256x256xf32>
      %cst_31 = arith.constant 1.000000e+00 : f32
      %64 = vector.broadcast %cst_31 : f32 to vector<256x256xf32>
      %65 = arith.subf %64, %61 : vector<256x256xf32>
      %66 = vector.broadcast %43 : f32 to vector<256x256xf32>
      %67 = arith.mulf %65, %66 : vector<256x256xf32>
      %68 = arith.addf %63, %67 : vector<256x256xf32>
      %cst_32 = arith.constant 0.000000e+00 : f32
      %69 = vector.broadcast %cst_32 : f32 to vector<256x256xf32>
      %70 = arith.subf %69, %68 : vector<256x256xf32>
      %71 = math.exp %70 : vector<256x256xf32>
      %72 = arith.truncf %71 : vector<256x256xf32> to vector<256x256xbf16>
      %c0_33 = arith.constant 0 : index
      %c0_34 = arith.constant 0 : index
      %73 = vector.load %arg10[%c0_33, %c0_34] : memref<256x256xbf16, #tpu.memory_space<vmem>>, vector<256x256xbf16>
      tpu.vector_store %arg10[%c0_33, %c0_34], %72 {strides = array<i32>} : memref<256x256xbf16, #tpu.memory_space<vmem>>, vector<256x256xbf16>,
      %cst_35 = arith.constant dense<0.000000e+00> : vector<256xf32>
      %74 = vector.multi_reduction <add>, %71, %cst_35 [0] : vector<256x256xf32> to vector<256xf32>
      %75 = vector.shape_cast %74 : vector<256xf32> to vector<1x256xf32>
      %76 = arith.addf %44, %75 : vector<1x256xf32>
      %c0_36 = arith.constant 0 : index
      %c0_37 = arith.constant 0 : index
      %77 = vector.load %arg11[%c0_36, %c0_37] : memref<1x256xf32, #tpu.memory_space<vmem>>, vector<1x256xf32>
      tpu.vector_store %arg11[%c0_36, %c0_37], %76 {strides = array<i32>} : memref<1x256xf32, #tpu.memory_space<vmem>>, vector<1x256xf32>,
      %c0_38 = arith.constant 0 : index
      %c0_39 = arith.constant 0 : index
      %78 = vector.load %arg8[%c0_38, %c0_39] : memref<4x256xf32, #tpu.memory_space<vmem>>, vector<4x256xf32>
      %c0_40 = arith.constant 0 : index
      %c0_41 = arith.constant 0 : index
      %79 = vector.load %arg9[%c0_40, %c0_41] : memref<4x256xf32, #tpu.memory_space<vmem>>, vector<4x256xf32>
      tpu.vector_store %arg9[%c0_40, %c0_41], %78 {strides = array<i32>} : memref<4x256xf32, #tpu.memory_space<vmem>>, vector<4x256xf32>,
    } else {
    }
    %c0 = arith.constant 0 : index
    %3 = memref.load %arg1[%c0] : memref<4xf32, #tpu.memory_space<smem>>
    %c1 = arith.constant 1 : index
    %4 = memref.load %arg1[%c1] : memref<4xf32, #tpu.memory_space<smem>>
    %c0_1 = arith.constant 0 : index
    %c0_2 = arith.constant 0 : index
    %5 = vector.load %arg9[%c0_1, %c0_2] : memref<4x256xf32, #tpu.memory_space<vmem>>, vector<4x256xf32>
    %6 = arith.truncf %5 : vector<4x256xf32> to vector<4x256xbf16>
    %c0_3 = arith.constant 0 : index
    %c0_4 = arith.constant 0 : index
    %7 = vector.load %arg10[%c0_3, %c0_4] : memref<256x256xbf16, #tpu.memory_space<vmem>>, vector<256x256xbf16>
    %cst = arith.constant dense<0.000000e+00> : vector<4x256xf32>
    %8 = tpu.matmul %6, %7, %cst {dimension_numbers = #tpu.dot_dimension_numbers<[1], [0], [0], [1], [0, 0, 1, 1], [], []>} : vector<4x256xbf16>, vector<256x256xbf16>, vector<4x256xf32> -> vector<4x256xf32>
    %c0_5 = arith.constant 0 : index
    %c0_6 = arith.constant 0 : index
    %9 = vector.load %arg6[%c0_5, %c0_6] : memref<4x256xf32, #tpu.memory_space<vmem>>, vector<4x256xf32>
    %10 = vector.broadcast %3 : f32 to vector<4x256xf32>
    %11 = arith.mulf %10, %8 : vector<4x256xf32>
    %12 = arith.addf %9, %11 : vector<4x256xf32>
    %13 = vector.broadcast %4 : f32 to vector<4x256xf32>
    %14 = arith.addf %12, %13 : vector<4x256xf32>
    %cst_7 = arith.constant dense<0.000000e+00> : vector<256xf32>
    %15 = vector.multi_reduction <add>, %5, %cst_7 [0] : vector<4x256xf32> to vector<256xf32>
    %16 = vector.shape_cast %15 : vector<256xf32> to vector<1x256xf32>
    %c0_8 = arith.constant 0 : index
    %c0_9 = arith.constant 0 : index
    %17 = vector.load %arg7[%c0_8, %c0_9] : memref<4x4xf32, #tpu.memory_space<vmem>>, vector<4x4xf32>
    %cst_10 = arith.constant dense<0.000000e+00> : vector<4x256xf32>
    %18 = tpu.matmul %17, %5, %cst_10 {dimension_numbers = #tpu.dot_dimension_numbers<[1], [0], [0], [1], [0, 0, 1, 1], [], []>} : vector<4x4xf32>, vector<4x256xf32>, vector<4x256xf32> -> vector<4x256xf32>
    %c0_11 = arith.constant 0 : index
    %c0_12 = arith.constant 0 : index
    %19 = vector.load %arg11[%c0_11, %c0_12] : memref<1x256xf32, #tpu.memory_space<vmem>>, vector<1x256xf32>
    %20 = vector.broadcast %19 : vector<1x256xf32> to vector<4x256xf32>
    %21 = arith.mulf %20, %5 : vector<4x256xf32>
    %22 = vector.broadcast %3 : f32 to vector<4x256xf32>
    %23 = arith.mulf %22, %21 : vector<4x256xf32>
    %24 = arith.addf %18, %23 : vector<4x256xf32>
    %25 = vector.broadcast %4 : f32 to vector<1x256xf32>
    %26 = arith.mulf %25, %16 : vector<1x256xf32>
    %27 = vector.broadcast %26 : vector<1x256xf32> to vector<4x256xf32>
    %28 = arith.addf %24, %27 : vector<4x256xf32>
    %cst_13 = arith.constant 1.1920929E-7 : f32
    %29 = vector.broadcast %cst_13 : f32 to vector<4x256xf32>
    %30 = arith.addf %28, %29 : vector<4x256xf32>
    %31 = arith.divf %14, %30 : vector<4x256xf32>
    %32 = arith.mulf %5, %31 : vector<4x256xf32>
    %cst_14 = arith.constant 1.000000e-03 : f32
    %33 = vector.broadcast %cst_14 : f32 to vector<4x256xf32>
    %34 = arith.cmpf olt, %32, %33 : vector<4x256xf32>
    %cst_15 = arith.constant 0.000000e+00 : f32
    %35 = vector.broadcast %cst_15 : f32 to vector<4x256xf32>
    %36 = arith.select %34, %35, %32 : vector<4x256xi1>, vector<4x256xf32>
    %cst_16 = arith.constant dense<0.000000e+00> : vector<256xf32>
    %37 = vector.multi_reduction <add>, %36, %cst_16 [0] : vector<4x256xf32> to vector<256xf32>
    %38 = vector.shape_cast %37 : vector<256xf32> to vector<1x256xf32>
    %39 = vector.broadcast %38 : vector<1x256xf32> to vector<4x256xf32>
    %40 = arith.divf %36, %39 : vector<4x256xf32>
    %c0_17 = arith.constant 0 : index
    %c0_18 = arith.constant 0 : index
    %41 = vector.load %arg9[%c0_17, %c0_18] : memref<4x256xf32, #tpu.memory_space<vmem>>, vector<4x256xf32>
    tpu.vector_store %arg9[%c0_17, %c0_18], %40 {strides = array<i32>} : memref<4x256xf32, #tpu.memory_space<vmem>>, vector<4x256xf32>,
    return
  }
  func.func @transform_0(%arg0: i32) -> i32 {
    %c0_i32 = arith.constant 0 : i32
    %c0_i32_0 = arith.constant 0 : i32
    return %c0_i32 : i32
  }
  func.func @transform_1(%arg0: i32) -> (i32, i32) {
    %c0_i32 = arith.constant 0 : i32
    %c0_i32_0 = arith.constant 0 : i32
    %c0_i32_1 = arith.constant 0 : i32
    return %c0_i32, %c0_i32_0 : i32, i32
  }
  func.func @transform_2(%arg0: i32) -> (i32, i32) {
    %c0_i32 = arith.constant 0 : i32
    %c0_i32_0 = arith.constant 0 : i32
    %c0_i32_1 = arith.constant 0 : i32
    return %c0_i32, %c0_i32_0 : i32, i32
  }
  func.func @transform_3(%arg0: i32) -> (i32, i32) {
    %c0_i32 = arith.constant 0 : i32
    %c0_i32_0 = arith.constant 0 : i32
    %c0_i32_1 = arith.constant 0 : i32
    return %c0_i32, %c0_i32_0 : i32, i32
  }
  func.func @transform_4(%arg0: i32) -> (i32, i32) {
    %c0_i32 = arith.constant 0 : i32
    %c0_i32_0 = arith.constant 0 : i32
    %c0_i32_1 = arith.constant 0 : i32
    return %c0_i32, %c0_i32_0 : i32, i32
  }
  func.func @transform_5(%arg0: i32) -> (i32, i32) {
    %c0_i32 = arith.constant 0 : i32
    %c0_i32_0 = arith.constant 0 : i32
    %c0_i32_1 = arith.constant 0 : i32
    return %c0_i32, %c0_i32_0 : i32, i32
  }
  func.func @transform_6(%arg0: i32) -> (i32, i32) {
    %c0_i32 = arith.constant 0 : i32
    %c0_i32_0 = arith.constant 0 : i32
    %c0_i32_1 = arith.constant 0 : i32
    return %c0_i32, %c0_i32_0 : i32, i32
  }
  func.func @transform_7(%arg0: i32) -> (i32, i32) {
    %c0_i32 = arith.constant 0 : i32
    %c0_i32_0 = arith.constant 0 : i32
    %c0_i32_1 = arith.constant 0 : i32
    return %c0_i32, %c0_i32_0 : i32, i32
  }
  func.func @transform_8(%arg0: i32) -> (i32, i32) {
    %c0_i32 = arith.constant 0 : i32
    %c0_i32_0 = arith.constant 0 : i32
    %c0_i32_1 = arith.constant 0 : i32
    return %c0_i32, %c0_i32_0 : i32, i32
  }
}

</mosaic_0001>

<llo_original>
// kernel: tpu_custom_call.1
$region0: #{tpu_custom_call.1}
  #allocation0 [shape = 'u32[]', space=smem, size = 0x4, offset = 0x4, fixed_abs, tag = 'smem constant byte address 0x4 - core index']
  #allocation1 [shape = 'u32[144,128]{1,0:T(1,128)}', space=vmem, size = 0x12000, scoped, tag = 'internal scratch']
  #allocation2 [shape = 'bf16[256,256]{1,0:T(16,128)(2,1)}', space=vmem, size = 0x20000, scoped, tag = 'scratch operand']
  #allocation3 [shape = 'f32[1,256]{1,0:T(1,128)}', space=vmem, size = 0x400, scoped, tag = 'scratch operand']
  %s0 = inlined_call_operand.vmem [shape: f32[4], index: 0, kind: input, shape index: {}]
  %s1 = inlined_call_operand.vmem [shape: f32[256,2], index: 1, kind: input, shape index: {}]
  %s2 = inlined_call_operand.vmem [shape: f32[2,256], index: 2, kind: input, shape index: {}]
  %s3 = inlined_call_operand.vmem [shape: f32[256,3], index: 3, kind: input, shape index: {}]
  %s4 = inlined_call_operand.vmem [shape: f32[3,256], index: 4, kind: input, shape index: {}]
  %s5 = inlined_call_operand.vmem [shape: f32[4,256], index: 5, kind: input, shape index: {}]
  %s6 = inlined_call_operand.vmem [shape: f32[4,4], index: 6, kind: input, shape index: {}]
  %s7 = inlined_call_operand.vmem [shape: f32[4,256], index: 7, kind: input, shape index: {}]
  %s8 = inlined_call_operand.hbm [shape: f32[4,256], index: 8, kind: output, shape index: {}]
  %s9 = sld [smem:[#allocation0]]
  $region73: #{tpu_custom_call.1} parent=0
    _
  %s11 = ssub.s32 1, %s9
  %s12 = scalar_select 0, %s11, %s9
  $region1: #{tpu_custom_call.1} parent=0
    #allocation4 [shape = 'u8[512]{0}', space=smem, size = 0x200, scoped, tag = 'input window, operand 0, single buffered']
    #allocation5 [shape = 's32[2]{0}', space=sflag, size = 0x8, scoped, tag = 'scoped memory for tpu_custom_call.1']
    #allocation6 [shape = 's32[2]{0}', space=sflag, size = 0x8, scoped, tag = 'scoped memory for tpu_custom_call.1']
    #allocation7 [shape = 'u8[4096]{0}', space=vmem, size = 0x1000, scoped, tag = 'output window, operand 0, single buffered']
    %13 = vsyncpa [#allocation6], 0
    %14 = vsyncpa [#allocation5], 0
    loop: start=0, step=1, limit=5
    $region2: #{tpu_custom_call.1} parent=1 // loop_pre_header
      _
    $region3: #{tpu_custom_call.1} parent=1 // loop_header
      %s16 = sphi 0, %s20
      %p17 = scmp.ge.s32.totalorder %s16, 5
      %s24 = sphi 0, %s24
      %s26 = sphi 0, %s24
      %s27 = sphi 0, %s26
      %s41 = sphi 0, %s27
      %s45 = sphi 0, %s45
      %s47 = sphi 0, %s45
      %s48 = sphi 0, %s47
      %s62 = sphi 0, %s48
      %s66 = sphi 0, %s66
      %s68 = sphi 0, %s66
      %s69 = sphi 0, %s68
      %s83 = sphi 0, %s69
      %s87 = sphi 0, %s87
      %s89 = sphi 0, %s87
      %s90 = sphi 0, %s89
      %s104 = sphi 0, %s90
      %s108 = sphi 0, %s108
      %s110 = sphi 0, %s108
      %s111 = sphi 0, %s110
      %s125 = sphi 0, %s111
      %s129 = sphi 0, %s129
      %s131 = sphi 0, %s129
      %s132 = sphi 0, %s131
      %s146 = sphi 0, %s132
      %s150 = sphi 0, %s150
      %s152 = sphi 0, %s150
      %s153 = sphi 0, %s152
      %s167 = sphi 0, %s153
      %s171 = sphi 0, %s171
      %s173 = sphi 0, %s171
      %s174 = sphi 0, %s173
      %s188 = sphi 0, %s174
      %s192 = sphi 0, %s192
      %s194 = sphi 0, %s192
      %s195 = sphi 0, %s194
      %s209 = sphi 0, %s195
    $region4: #{tpu_custom_call.1} parent=1 // loop_header_branch
      %19 = sbr.rel (%p17) target = $region8
    $region5: #{tpu_custom_call.1} parent=1 // loop_body
      %s21 = ssub.s32 %s16, 1
      %s22 = ssub.s32 %s16, 2
      %s23 = sadd.s32 %s16, 1
      %s25 = sadd.s32 %s24, 1
      %p28 = scmp.eq.s32.totalorder %s16, 2
      %p29 = scmp.ne.s32.totalorder %s24, %s26
      %p30 = scmp.eq.s32.totalorder %s16, 0
      %p31 = por %p29, %p30
      %p32 = scmp.ne.s32.totalorder %s24, %s26
      %p33 = scmp.eq.s32.totalorder %s21, 2
      %p34 = por %p32, %p33
      %p35 = scmp.ne.s32.totalorder %s26, %s27
      %p36 = scmp.eq.s32.totalorder %s21, 0
      %p37 = por %p35, %p36
      %p38 = scmp.ne.s32.totalorder %s26, %s27
      %p39 = scmp.eq.s32.totalorder %s22, 2
      %p40 = por %p38, %p39
      %p42 = scmp.ne.s32.totalorder %s27, %s41
      %p43 = scmp.eq.s32.totalorder %s22, 0
      %p44 = por %p42, %p43
      %s46 = sadd.s32 %s45, 1
      %p49 = scmp.eq.s32.totalorder %s16, 2
      %p50 = scmp.ne.s32.totalorder %s45, %s47
      %p51 = scmp.eq.s32.totalorder %s16, 0
      %p52 = por %p50, %p51
      %p53 = scmp.ne.s32.totalorder %s45, %s47
      %p54 = scmp.eq.s32.totalorder %s21, 2
      %p55 = por %p53, %p54
      %p56 = scmp.ne.s32.totalorder %s47, %s48
      %p57 = scmp.eq.s32.totalorder %s21, 0
      %p58 = por %p56, %p57
      %p59 = scmp.ne.s32.totalorder %s47, %s48
      %p60 = scmp.eq.s32.totalorder %s22, 2
      %p61 = por %p59, %p60
      %p63 = scmp.ne.s32.totalorder %s48, %s62
      %p64 = scmp.eq.s32.totalorder %s22, 0
      %p65 = por %p63, %p64
      %s67 = sadd.s32 %s66, 1
      %p70 = scmp.eq.s32.totalorder %s16, 2
      %p71 = scmp.ne.s32.totalorder %s66, %s68
      %p72 = scmp.eq.s32.totalorder %s16, 0
      %p73 = por %p71, %p72
      %p74 = scmp.ne.s32.totalorder %s66, %s68
      %p75 = scmp.eq.s32.totalorder %s21, 2
      %p76 = por %p74, %p75
      %p77 = scmp.ne.s32.totalorder %s68, %s69
      %p78 = scmp.eq.s32.totalorder %s21, 0
      %p79 = por %p77, %p78
      %p80 = scmp.ne.s32.totalorder %s68, %s69
      %p81 = scmp.eq.s32.totalorder %s22, 2
      %p82 = por %p80, %p81
      %p84 = scmp.ne.s32.totalorder %s69, %s83
      %p85 = scmp.eq.s32.totalorder %s22, 0
      %p86 = por %p84, %p85
      %s88 = sadd.s32 %s87, 1
      %p91 = scmp.eq.s32.totalorder %s16, 2
      %p92 = scmp.ne.s32.totalorder %s87, %s89
      %p93 = scmp.eq.s32.totalorder %s16, 0
      %p94 = por %p92, %p93
      %p95 = scmp.ne.s32.totalorder %s87, %s89
      %p96 = scmp.eq.s32.totalorder %s21, 2
      %p97 = por %p95, %p96
      %p98 = scmp.ne.s32.totalorder %s89, %s90
      %p99 = scmp.eq.s32.totalorder %s21, 0
      %p100 = por %p98, %p99
      %p101 = scmp.ne.s32.totalorder %s89, %s90
      %p102 = scmp.eq.s32.totalorder %s22, 2
      %p103 = por %p101, %p102
      %p105 = scmp.ne.s32.totalorder %s90, %s104
      %p106 = scmp.eq.s32.totalorder %s22, 0
      %p107 = por %p105, %p106
      %s109 = sadd.s32 %s108, 1
      %p112 = scmp.eq.s32.totalorder %s16, 2
      %p113 = scmp.ne.s32.totalorder %s108, %s110
      %p114 = scmp.eq.s32.totalorder %s16, 0
      %p115 = por %p113, %p114
      %p116 = scmp.ne.s32.totalorder %s108, %s110
      %p117 = scmp.eq.s32.totalorder %s21, 2
      %p118 = por %p116, %p117
      %p119 = scmp.ne.s32.totalorder %s110, %s111
      %p120 = scmp.eq.s32.totalorder %s21, 0
      %p121 = por %p119, %p120
      %p122 = scmp.ne.s32.totalorder %s110, %s111
      %p123 = scmp.eq.s32.totalorder %s22, 2
      %p124 = por %p122, %p123
      %p126 = scmp.ne.s32.totalorder %s111, %s125
      %p127 = scmp.eq.s32.totalorder %s22, 0
      %p128 = por %p126, %p127
      %s130 = sadd.s32 %s129, 1
      %p133 = scmp.eq.s32.totalorder %s16, 2
      %p134 = scmp.ne.s32.totalorder %s129, %s131
      %p135 = scmp.eq.s32.totalorder %s16, 0
      %p136 = por %p134, %p135
      %p137 = scmp.ne.s32.totalorder %s129, %s131
      %p138 = scmp.eq.s32.totalorder %s21, 2
      %p139 = por %p137, %p138
      %p140 = scmp.ne.s32.totalorder %s131, %s132
      %p141 = scmp.eq.s32.totalorder %s21, 0
      %p142 = por %p140, %p141
      %p143 = scmp.ne.s32.totalorder %s131, %s132
      %p144 = scmp.eq.s32.totalorder %s22, 2
      %p145 = por %p143, %p144
      %p147 = scmp.ne.s32.totalorder %s132, %s146
      %p148 = scmp.eq.s32.totalorder %s22, 0
      %p149 = por %p147, %p148
      %s151 = sadd.s32 %s150, 1
      %p154 = scmp.eq.s32.totalorder %s16, 2
      %p155 = scmp.ne.s32.totalorder %s150, %s152
      %p156 = scmp.eq.s32.totalorder %s16, 0
      %p157 = por %p155, %p156
      %p158 = scmp.ne.s32.totalorder %s150, %s152
      %p159 = scmp.eq.s32.totalorder %s21, 2
      %p160 = por %p158, %p159
      %p161 = scmp.ne.s32.totalorder %s152, %s153
      %p162 = scmp.eq.s32.totalorder %s21, 0
      %p163 = por %p161, %p162
      %p164 = scmp.ne.s32.totalorder %s152, %s153
      %p165 = scmp.eq.s32.totalorder %s22, 2
      %p166 = por %p164, %p165
      %p168 = scmp.ne.s32.totalorder %s153, %s167
      %p169 = scmp.eq.s32.totalorder %s22, 0
      %p170 = por %p168, %p169
      %s172 = sadd.s32 %s171, 1
      %p175 = scmp.eq.s32.totalorder %s16, 2
      %p176 = scmp.ne.s32.totalorder %s171, %s173
      %p177 = scmp.eq.s32.totalorder %s16, 0
      %p178 = por %p176, %p177
      %p179 = scmp.ne.s32.totalorder %s171, %s173
      %p180 = scmp.eq.s32.totalorder %s21, 2
      %p181 = por %p179, %p180
      %p182 = scmp.ne.s32.totalorder %s173, %s174
      %p183 = scmp.eq.s32.totalorder %s21, 0
      %p184 = por %p182, %p183
      %p185 = scmp.ne.s32.totalorder %s173, %s174
      %p186 = scmp.eq.s32.totalorder %s22, 2
      %p187 = por %p185, %p186
      %p189 = scmp.ne.s32.totalorder %s174, %s188
      %p190 = scmp.eq.s32.totalorder %s22, 0
      %p191 = por %p189, %p190
      %s193 = sadd.s32 %s192, 1
      %p196 = scmp.eq.s32.totalorder %s16, 2
      %p197 = scmp.ne.s32.totalorder %s192, %s194
      %p198 = scmp.eq.s32.totalorder %s16, 0
      %p199 = por %p197, %p198
      %p200 = scmp.ne.s32.totalorder %s192, %s194
      %p201 = scmp.eq.s32.totalorder %s21, 2
      %p202 = por %p200, %p201
      %p203 = scmp.ne.s32.totalorder %s194, %s195
      %p204 = scmp.eq.s32.totalorder %s21, 0
      %p205 = por %p203, %p204
      %p206 = scmp.ne.s32.totalorder %s194, %s195
      %p207 = scmp.eq.s32.totalorder %s22, 2
      %p208 = por %p206, %p207
      %p210 = scmp.ne.s32.totalorder %s195, %s209
      %p211 = scmp.eq.s32.totalorder %s22, 0
      %p212 = por %p210, %p211
      %p213 = scmp.le.s32.totalorder 1, %s16
      %p214 = scmp.lt.s32.totalorder %s16, 4
      %p215 = pnand %p213, %p214
      %p216 = pneg %p215
      // Predicated region
      $region9: #{tpu_custom_call.1} parent=5 // pred_check
        _
      $region10: #{tpu_custom_call.1} parent=5 // pred_check_branch
        %218 = sbr.rel (%p215) target = $region12
      $region11: #{tpu_custom_call.1} parent=5 // pred_region
        %s219 = ssub.s32 %s16, 1
        // Predicated region
        $region13: #{tpu_custom_call.1} parent=11 // pred_check
          %p220 = pneg %p37
        $region14: #{tpu_custom_call.1} parent=11 // pred_check_branch
          %222 = sbr.rel (%p220) target = $region16
        $region15: #{tpu_custom_call.1} parent=11 // pred_region
          %s224 = ssub.s32 16, 16
          %225 = vsyncadd [#allocation6], %s224
          %s227 = sshll.u32 %s0, 4
          %s228 = int_to_ptr.vmem [resolvable:$true] %s227
          %230 = dma.vmem_to_smem %s228, 16, [#allocation4], [#allocation6]
        $region16: #{tpu_custom_call.1} parent=11 // pred_fallthru
          _
        // Predicated region
        $region17: #{tpu_custom_call.1} parent=11 // pred_check
          %p231 = pneg %p58
        $region18: #{tpu_custom_call.1} parent=11 // pred_check_branch
          %233 = sbr.rel (%p231) target = $region20
        $region19: #{tpu_custom_call.1} parent=11 // pred_region
          _
        $region20: #{tpu_custom_call.1} parent=11 // pred_fallthru
          _
        // Predicated region
        $region21: #{tpu_custom_call.1} parent=11 // pred_check
          %p234 = pneg %p79
        $region22: #{tpu_custom_call.1} parent=11 // pred_check_branch
          %236 = sbr.rel (%p234) target = $region24
        $region23: #{tpu_custom_call.1} parent=11 // pred_region
          _
        $region24: #{tpu_custom_call.1} parent=11 // pred_fallthru
          _
        // Predicated region
        $region25: #{tpu_custom_call.1} parent=11 // pred_check
          %p237 = pneg %p100
        $region26: #{tpu_custom_call.1} parent=11 // pred_check_branch
          %239 = sbr.rel (%p237) target = $region28
        $region27: #{tpu_custom_call.1} parent=11 // pred_region
          _
        $region28: #{tpu_custom_call.1} parent=11 // pred_fallthru
          _
        // Predicated region
        $region29: #{tpu_custom_call.1} parent=11 // pred_check
          %p240 = pneg %p121
        $region30: #{tpu_custom_call.1} parent=11 // pred_check_branch
          %242 = sbr.rel (%p240) target = $region32
        $region31: #{tpu_custom_call.1} parent=11 // pred_region
          _
        $region32: #{tpu_custom_call.1} parent=11 // pred_fallthru
          _
        // Predicated region
        $region33: #{tpu_custom_call.1} parent=11 // pred_check
          %p243 = pneg %p142
        $region34: #{tpu_custom_call.1} parent=11 // pred_check_branch
          %245 = sbr.rel (%p243) target = $region36
        $region35: #{tpu_custom_call.1} parent=11 // pred_region
          _
        $region36: #{tpu_custom_call.1} parent=11 // pred_fallthru
          _
        // Predicated region
        $region37: #{tpu_custom_call.1} parent=11 // pred_check
          %p246 = pneg %p163
        $region38: #{tpu_custom_call.1} parent=11 // pred_check_branch
          %248 = sbr.rel (%p246) target = $region40
        $region39: #{tpu_custom_call.1} parent=11 // pred_region
          _
        $region40: #{tpu_custom_call.1} parent=11 // pred_fallthru
          _
        // Predicated region
        $region41: #{tpu_custom_call.1} parent=11 // pred_check
          %p249 = pneg %p184
        $region42: #{tpu_custom_call.1} parent=11 // pred_check_branch
          %251 = sbr.rel (%p249) target = $region44
        $region43: #{tpu_custom_call.1} parent=11 // pred_region
          _
        $region44: #{tpu_custom_call.1} parent=11 // pred_fallthru
          _
      $region12: #{tpu_custom_call.1} parent=5 // pred_fallthru
        _
      %p252 = scmp.lt.s32.totalorder %s16, 3
      // Predicated region
      $region45: #{tpu_custom_call.1} parent=5 // pred_check
        %p253 = pneg %p252
      $region46: #{tpu_custom_call.1} parent=5 // pred_check_branch
        %255 = sbr.rel (%p253) target = $region48
      $region47: #{tpu_custom_call.1} parent=5 // pred_region
        _
      $region48: #{tpu_custom_call.1} parent=5 // pred_fallthru
        _
      %p256 = scmp.le.s32.totalorder 1, %s16
      %p257 = scmp.lt.s32.totalorder %s16, 4
      %p258 = pnand %p256, %p257
      %p259 = pneg %p258
      // Predicated region
      $region49: #{tpu_custom_call.1} parent=5 // pred_check
        _
      $region50: #{tpu_custom_call.1} parent=5 // pred_check_branch
        %261 = sbr.rel (%p258) target = $region52
      $region51: #{tpu_custom_call.1} parent=5 // pred_region
        %s262 = ssub.s32 %s16, 1
        // Predicated region
        $region53: #{tpu_custom_call.1} parent=51 // pred_check
          %p263 = pneg %p37
        $region54: #{tpu_custom_call.1} parent=51 // pred_check_branch
          %265 = sbr.rel (%p263) target = $region56
        $region55: #{tpu_custom_call.1} parent=51 // pred_region
          %266 = dma.done [#allocation6], 16
        $region56: #{tpu_custom_call.1} parent=51 // pred_fallthru
          _
        %267 = sfence
        %p268 = pneg %p37
        %p269 = pneg %p34
        %p270 = pneg %p58
        %p271 = pneg %p55
        %p272 = pneg %p79
        %p273 = pneg %p76
        %p274 = pneg %p100
        %p275 = pneg %p97
        %p276 = pneg %p121
        %p277 = pneg %p118
        %p278 = pneg %p142
        %p279 = pneg %p139
        %p280 = pneg %p163
        %p281 = pneg %p160
        %p282 = pneg %p184
        %p283 = pneg %p181
        %p284 = pneg %p205
        %p285 = pneg %p202
        %p286 = scmp.eq.s32.totalorder %s21, 0
        // Predicated region
        $region57: #{tpu_custom_call.1} parent=51 // pred_check
          %p287 = pneg %p286
        $region58: #{tpu_custom_call.1} parent=51 // pred_check_branch
          %289 = sbr.rel (%p287) target = $region60
        $region59: #{tpu_custom_call.1} parent=51 // pred_region
          %s290 = sld [smem:[#allocation4 + $0x2]]
          %s291 = sld [smem:[#allocation4 + $0x3]]
          %v292 = vld [vmem:[%s1] sm:$0xff]
          %v293 = vld [vmem:[%s1 + $0x8] sm:$0xff]
          %v294 = vld [vmem:[%s1 + $0x10] sm:$0xff]
          %v295 = vld [vmem:[%s1 + $0x18] sm:$0xff]
          %v296 = vld [vmem:[%s1 + $0x20] sm:$0xff]
          %v297 = vld [vmem:[%s1 + $0x28] sm:$0xff]
          %v298 = vld [vmem:[%s1 + $0x30] sm:$0xff]
          %v299 = vld [vmem:[%s1 + $0x38] sm:$0xff]
          %v300 = vld [vmem:[%s1 + $0x40] sm:$0xff]
          %v301 = vld [vmem:[%s1 + $0x48] sm:$0xff]
          %v302 = vld [vmem:[%s1 + $0x50] sm:$0xff]
          %v303 = vld [vmem:[%s1 + $0x58] sm:$0xff]
          %v304 = vld [vmem:[%s1 + $0x60] sm:$0xff]
          %v305 = vld [vmem:[%s1 + $0x68] sm:$0xff]
          %v306 = vld [vmem:[%s1 + $0x70] sm:$0xff]
          %v307 = vld [vmem:[%s1 + $0x78] sm:$0xff]
          %v308 = vld [vmem:[%s1 + $0x80] sm:$0xff]
          %v309 = vld [vmem:[%s1 + $0x88] sm:$0xff]
          %v310 = vld [vmem:[%s1 + $0x90] sm:$0xff]
          %v311 = vld [vmem:[%s1 + $0x98] sm:$0xff]
          %v312 = vld [vmem:[%s1 + $0xa0] sm:$0xff]
          %v313 = vld [vmem:[%s1 + $0xa8] sm:$0xff]
          %v314 = vld [vmem:[%s1 + $0xb0] sm:$0xff]
          %v315 = vld [vmem:[%s1 + $0xb8] sm:$0xff]
          %v316 = vld [vmem:[%s1 + $0xc0] sm:$0xff]
          %v317 = vld [vmem:[%s1 + $0xc8] sm:$0xff]
          %v318 = vld [vmem:[%s1 + $0xd0] sm:$0xff]
          %v319 = vld [vmem:[%s1 + $0xd8] sm:$0xff]
          %v320 = vld [vmem:[%s1 + $0xe0] sm:$0xff]
          %v321 = vld [vmem:[%s1 + $0xe8] sm:$0xff]
          %v322 = vld [vmem:[%s1 + $0xf0] sm:$0xff]
          %v323 = vld [vmem:[%s1 + $0xf8] sm:$0xff]
          %v324 = vld [vmem:[%s2] ss:$2 sm:$0x3]
          %326 = vset.pattern.permute.xlu0 0
          %327 = vperm.xlu0 %326, %v292
          %v328 = vpop.permute.xlu0 %327
          %331 = vset.pattern.permute.xlu0 0
          %332 = vperm.xlu0 %331, %v293
          %v333 = vpop.permute.xlu0 %332
          %336 = vset.pattern.permute.xlu0 0
          %337 = vperm.xlu0 %336, %v294
          %v338 = vpop.permute.xlu0 %337
          %341 = vset.pattern.permute.xlu0 0
          %342 = vperm.xlu0 %341, %v295
          %v343 = vpop.permute.xlu0 %342
          %346 = vset.pattern.permute.xlu0 0
          %347 = vperm.xlu0 %346, %v296
          %v348 = vpop.permute.xlu0 %347
          %351 = vset.pattern.permute.xlu0 0
          %352 = vperm.xlu0 %351, %v297
          %v353 = vpop.permute.xlu0 %352
          %356 = vset.pattern.permute.xlu0 0
          %357 = vperm.xlu0 %356, %v298
          %v358 = vpop.permute.xlu0 %357
          %361 = vset.pattern.permute.xlu0 0
          %362 = vperm.xlu0 %361, %v299
          %v363 = vpop.permute.xlu0 %362
          %366 = vset.pattern.permute.xlu0 0
          %367 = vperm.xlu0 %366, %v300
          %v368 = vpop.permute.xlu0 %367
          %371 = vset.pattern.permute.xlu0 0
          %372 = vperm.xlu0 %371, %v301
          %v373 = vpop.permute.xlu0 %372
          %376 = vset.pattern.permute.xlu0 0
          %377 = vperm.xlu0 %376, %v302
          %v378 = vpop.permute.xlu0 %377
          %381 = vset.pattern.permute.xlu0 0
          %382 = vperm.xlu0 %381, %v303
          %v383 = vpop.permute.xlu0 %382
          %386 = vset.pattern.permute.xlu0 0
          %387 = vperm.xlu0 %386, %v304
          %v388 = vpop.permute.xlu0 %387
          %391 = vset.pattern.permute.xlu0 0
          %392 = vperm.xlu0 %391, %v305
          %v393 = vpop.permute.xlu0 %392
          %396 = vset.pattern.permute.xlu0 0
          %397 = vperm.xlu0 %396, %v306
          %v398 = vpop.permute.xlu0 %397
          %401 = vset.pattern.permute.xlu0 0
          %402 = vperm.xlu0 %401, %v307
          %v403 = vpop.permute.xlu0 %402
          %406 = vset.pattern.permute.xlu0 0
          %407 = vperm.xlu0 %406, %v308
          %v408 = vpop.permute.xlu0 %407
          %411 = vset.pattern.permute.xlu0 0
          %412 = vperm.xlu0 %411, %v309
          %v413 = vpop.permute.xlu0 %412
          %416 = vset.pattern.permute.xlu0 0
          %417 = vperm.xlu0 %416, %v310
          %v418 = vpop.permute.xlu0 %417
          %421 = vset.pattern.permute.xlu0 0
          %422 = vperm.xlu0 %421, %v311
          %v423 = vpop.permute.xlu0 %422
          %426 = vset.pattern.permute.xlu0 0
          %427 = vperm.xlu0 %426, %v312
          %v428 = vpop.permute.xlu0 %427
          %431 = vset.pattern.permute.xlu0 0
          %432 = vperm.xlu0 %431, %v313
          %v433 = vpop.permute.xlu0 %432
          %436 = vset.pattern.permute.xlu0 0
          %437 = vperm.xlu0 %436, %v314
          %v438 = vpop.permute.xlu0 %437
          %441 = vset.pattern.permute.xlu0 0
          %442 = vperm.xlu0 %441, %v315
          %v443 = vpop.permute.xlu0 %442
          %446 = vset.pattern.permute.xlu0 0
          %447 = vperm.xlu0 %446, %v316
          %v448 = vpop.permute.xlu0 %447
          %451 = vset.pattern.permute.xlu0 0
          %452 = vperm.xlu0 %451, %v317
          %v453 = vpop.permute.xlu0 %452
          %456 = vset.pattern.permute.xlu0 0
          %457 = vperm.xlu0 %456, %v318
          %v458 = vpop.permute.xlu0 %457
          %461 = vset.pattern.permute.xlu0 0
          %462 = vperm.xlu0 %461, %v319
          %v463 = vpop.permute.xlu0 %462
          %466 = vset.pattern.permute.xlu0 0
          %467 = vperm.xlu0 %466, %v320
          %v468 = vpop.permute.xlu0 %467
          %471 = vset.pattern.permute.xlu0 0
          %472 = vperm.xlu0 %471, %v321
          %v473 = vpop.permute.xlu0 %472
          %476 = vset.pattern.permute.xlu0 0
          %477 = vperm.xlu0 %476, %v322
          %v478 = vpop.permute.xlu0 %477
          %481 = vset.pattern.permute.xlu0 0
          %482 = vperm.xlu0 %481, %v323
          %v483 = vpop.permute.xlu0 %482
          %v486 = vlaneseq
          %v487 = vshrl.u32 %v486, 7
          %v488 = vsub.s32 0, %v487
          %v489 = vrot.slane %v324, %v488
          %v490 = vlaneseq
          %v491 = vshrl.u32 %v490, 7
          %v492 = vsub.s32 1, %v491
          %v493 = vrot.slane %v324, %v492
          %v496 = vsub.f32 %v328, %v489
          %v497 = vsub.f32 %v328, %v493
          %v498 = vsub.f32 %v333, %v489
          %v499 = vsub.f32 %v333, %v493
          %v500 = vsub.f32 %v338, %v489
          %v501 = vsub.f32 %v338, %v493
          %v502 = vsub.f32 %v343, %v489
          %v503 = vsub.f32 %v343, %v493
          %v504 = vsub.f32 %v348, %v489
          %v505 = vsub.f32 %v348, %v493
          %v506 = vsub.f32 %v353, %v489
          %v507 = vsub.f32 %v353, %v493
          %v508 = vsub.f32 %v358, %v489
          %v509 = vsub.f32 %v358, %v493
          %v510 = vsub.f32 %v363, %v489
          %v511 = vsub.f32 %v363, %v493
          %v512 = vsub.f32 %v368, %v489
          %v513 = vsub.f32 %v368, %v493
          %v514 = vsub.f32 %v373, %v489
          %v515 = vsub.f32 %v373, %v493
          %v516 = vsub.f32 %v378, %v489
          %v517 = vsub.f32 %v378, %v493
          %v518 = vsub.f32 %v383, %v489
          %v519 = vsub.f32 %v383, %v493
          %v520 = vsub.f32 %v388, %v489
          %v521 = vsub.f32 %v388, %v493
          %v522 = vsub.f32 %v393, %v489
          %v523 = vsub.f32 %v393, %v493
          %v524 = vsub.f32 %v398, %v489
          %v525 = vsub.f32 %v398, %v493
          %v526 = vsub.f32 %v403, %v489
          %v527 = vsub.f32 %v403, %v493
          %v528 = vsub.f32 %v408, %v489
          %v529 = vsub.f32 %v408, %v493
          %v530 = vsub.f32 %v413, %v489
          %v531 = vsub.f32 %v413, %v493
          %v532 = vsub.f32 %v418, %v489
          %v533 = vsub.f32 %v418, %v493
          %v534 = vsub.f32 %v423, %v489
          %v535 = vsub.f32 %v423, %v493
          %v536 = vsub.f32 %v428, %v489
          %v537 = vsub.f32 %v428, %v493
          %v538 = vsub.f32 %v433, %v489
          %v539 = vsub.f32 %v433, %v493
          %v540 = vsub.f32 %v438, %v489
          %v541 = vsub.f32 %v438, %v493
          %v542 = vsub.f32 %v443, %v489
          %v543 = vsub.f32 %v443, %v493
          %v544 = vsub.f32 %v448, %v489
          %v545 = vsub.f32 %v448, %v493
          %v546 = vsub.f32 %v453, %v489
          %v547 = vsub.f32 %v453, %v493
          %v548 = vsub.f32 %v458, %v489
          %v549 = vsub.f32 %v458, %v493
          %v550 = vsub.f32 %v463, %v489
          %v551 = vsub.f32 %v463, %v493
          %v552 = vsub.f32 %v468, %v489
          %v553 = vsub.f32 %v468, %v493
          %v554 = vsub.f32 %v473, %v489
          %v555 = vsub.f32 %v473, %v493
          %v556 = vsub.f32 %v478, %v489
          %v557 = vsub.f32 %v478, %v493
          %v558 = vsub.f32 %v483, %v489
          %v559 = vsub.f32 %v483, %v493
          %s560 = scalar_lea.vmem %s2, 1
          %v561 = vld [vmem:[%s560] ss:$2 sm:$0x3]
          %562 = vset.pattern.permute.xlu0 1
          %563 = vperm.xlu0 %562, %v292
          %v564 = vpop.permute.xlu0 %563
          %566 = vset.pattern.permute.xlu0 1
          %567 = vperm.xlu0 %566, %v293
          %v568 = vpop.permute.xlu0 %567
          %570 = vset.pattern.permute.xlu0 1
          %571 = vperm.xlu0 %570, %v294
          %v572 = vpop.permute.xlu0 %571
          %574 = vset.pattern.permute.xlu0 1
          %575 = vperm.xlu0 %574, %v295
          %v576 = vpop.permute.xlu0 %575
          %578 = vset.pattern.permute.xlu0 1
          %579 = vperm.xlu0 %578, %v296
          %v580 = vpop.permute.xlu0 %579
          %582 = vset.pattern.permute.xlu0 1
          %583 = vperm.xlu0 %582, %v297
          %v584 = vpop.permute.xlu0 %583
          %586 = vset.pattern.permute.xlu0 1
          %587 = vperm.xlu0 %586, %v298
          %v588 = vpop.permute.xlu0 %587
          %590 = vset.pattern.permute.xlu0 1
          %591 = vperm.xlu0 %590, %v299
          %v592 = vpop.permute.xlu0 %591
          %594 = vset.pattern.permute.xlu0 1
          %595 = vperm.xlu0 %594, %v300
          %v596 = vpop.permute.xlu0 %595
          %598 = vset.pattern.permute.xlu0 1
          %599 = vperm.xlu0 %598, %v301
          %v600 = vpop.permute.xlu0 %599
          %602 = vset.pattern.permute.xlu0 1
          %603 = vperm.xlu0 %602, %v302
          %v604 = vpop.permute.xlu0 %603
          %606 = vset.pattern.permute.xlu0 1
          %607 = vperm.xlu0 %606, %v303
          %v608 = vpop.permute.xlu0 %607
          %610 = vset.pattern.permute.xlu0 1
          %611 = vperm.xlu0 %610, %v304
          %v612 = vpop.permute.xlu0 %611
          %614 = vset.pattern.permute.xlu0 1
          %615 = vperm.xlu0 %614, %v305
          %v616 = vpop.permute.xlu0 %615
          %618 = vset.pattern.permute.xlu0 1
          %619 = vperm.xlu0 %618, %v306
          %v620 = vpop.permute.xlu0 %619
          %622 = vset.pattern.permute.xlu0 1
          %623 = vperm.xlu0 %622, %v307
          %v624 = vpop.permute.xlu0 %623
          %626 = vset.pattern.permute.xlu0 1
          %627 = vperm.xlu0 %626, %v308
          %v628 = vpop.permute.xlu0 %627
          %630 = vset.pattern.permute.xlu0 1
          %631 = vperm.xlu0 %630, %v309
          %v632 = vpop.permute.xlu0 %631
          %634 = vset.pattern.permute.xlu0 1
          %635 = vperm.xlu0 %634, %v310
          %v636 = vpop.permute.xlu0 %635
          %638 = vset.pattern.permute.xlu0 1
          %639 = vperm.xlu0 %638, %v311
          %v640 = vpop.permute.xlu0 %639
          %642 = vset.pattern.permute.xlu0 1
          %643 = vperm.xlu0 %642, %v312
          %v644 = vpop.permute.xlu0 %643
          %646 = vset.pattern.permute.xlu0 1
          %647 = vperm.xlu0 %646, %v313
          %v648 = vpop.permute.xlu0 %647
          %650 = vset.pattern.permute.xlu0 1
          %651 = vperm.xlu0 %650, %v314
          %v652 = vpop.permute.xlu0 %651
          %654 = vset.pattern.permute.xlu0 1
          %655 = vperm.xlu0 %654, %v315
          %v656 = vpop.permute.xlu0 %655
          %658 = vset.pattern.permute.xlu0 1
          %659 = vperm.xlu0 %658, %v316
          %v660 = vpop.permute.xlu0 %659
          %662 = vset.pattern.permute.xlu0 1
          %663 = vperm.xlu0 %662, %v317
          %v664 = vpop.permute.xlu0 %663
          %666 = vset.pattern.permute.xlu0 1
          %667 = vperm.xlu0 %666, %v318
          %v668 = vpop.permute.xlu0 %667
          %670 = vset.pattern.permute.xlu0 1
          %671 = vperm.xlu0 %670, %v319
          %v672 = vpop.permute.xlu0 %671
          %674 = vset.pattern.permute.xlu0 1
          %675 = vperm.xlu0 %674, %v320
          %v676 = vpop.permute.xlu0 %675
          %678 = vset.pattern.permute.xlu0 1
          %679 = vperm.xlu0 %678, %v321
          %v680 = vpop.permute.xlu0 %679
          %682 = vset.pattern.permute.xlu0 1
          %683 = vperm.xlu0 %682, %v322
          %v684 = vpop.permute.xlu0 %683
          %686 = vset.pattern.permute.xlu0 1
          %687 = vperm.xlu0 %686, %v323
          %v688 = vpop.permute.xlu0 %687
          %v691 = vlaneseq
          %v692 = vshrl.u32 %v691, 7
          %v693 = vsub.s32 0, %v692
          %v694 = vrot.slane %v561, %v693
          %v695 = vlaneseq
          %v696 = vshrl.u32 %v695, 7
          %v697 = vsub.s32 1, %v696
          %v698 = vrot.slane %v561, %v697
          %v701 = vsub.f32 %v564, %v694
          %v702 = vsub.f32 %v564, %v698
          %v703 = vsub.f32 %v568, %v694
          %v704 = vsub.f32 %v568, %v698
          %v705 = vsub.f32 %v572, %v694
          %v706 = vsub.f32 %v572, %v698
          %v707 = vsub.f32 %v576, %v694
          %v708 = vsub.f32 %v576, %v698
          %v709 = vsub.f32 %v580, %v694
          %v710 = vsub.f32 %v580, %v698
          %v711 = vsub.f32 %v584, %v694
          %v712 = vsub.f32 %v584, %v698
          %v713 = vsub.f32 %v588, %v694
          %v714 = vsub.f32 %v588, %v698
          %v715 = vsub.f32 %v592, %v694
          %v716 = vsub.f32 %v592, %v698
          %v717 = vsub.f32 %v596, %v694
          %v718 = vsub.f32 %v596, %v698
          %v719 = vsub.f32 %v600, %v694
          %v720 = vsub.f32 %v600, %v698
          %v721 = vsub.f32 %v604, %v694
          %v722 = vsub.f32 %v604, %v698
          %v723 = vsub.f32 %v608, %v694
          %v724 = vsub.f32 %v608, %v698
          %v725 = vsub.f32 %v612, %v694
          %v726 = vsub.f32 %v612, %v698
          %v727 = vsub.f32 %v616, %v694
          %v728 = vsub.f32 %v616, %v698
          %v729 = vsub.f32 %v620, %v694
          %v730 = vsub.f32 %v620, %v698
          %v731 = vsub.f32 %v624, %v694
          %v732 = vsub.f32 %v624, %v698
          %v733 = vsub.f32 %v628, %v694
          %v734 = vsub.f32 %v628, %v698
          %v735 = vsub.f32 %v632, %v694
          %v736 = vsub.f32 %v632, %v698
          %v737 = vsub.f32 %v636, %v694
          %v738 = vsub.f32 %v636, %v698
          %v739 = vsub.f32 %v640, %v694
          %v740 = vsub.f32 %v640, %v698
          %v741 = vsub.f32 %v644, %v694
          %v742 = vsub.f32 %v644, %v698
          %v743 = vsub.f32 %v648, %v694
          %v744 = vsub.f32 %v648, %v698
          %v745 = vsub.f32 %v652, %v694
          %v746 = vsub.f32 %v652, %v698
          %v747 = vsub.f32 %v656, %v694
          %v748 = vsub.f32 %v656, %v698
          %v749 = vsub.f32 %v660, %v694
          %v750 = vsub.f32 %v660, %v698
          %v751 = vsub.f32 %v664, %v694
          %v752 = vsub.f32 %v664, %v698
          %v753 = vsub.f32 %v668, %v694
          %v754 = vsub.f32 %v668, %v698
          %v755 = vsub.f32 %v672, %v694
          %v756 = vsub.f32 %v672, %v698
          %v757 = vsub.f32 %v676, %v694
          %v758 = vsub.f32 %v676, %v698
          %v759 = vsub.f32 %v680, %v694
          %v760 = vsub.f32 %v680, %v698
          %v761 = vsub.f32 %v684, %v694
          %v762 = vsub.f32 %v684, %v698
          %v763 = vsub.f32 %v688, %v694
          %v764 = vsub.f32 %v688, %v698
          %v765 = vmul.f32 %v496, %v496
          %v766 = vmul.f32 %v497, %v497
          %v767 = vmul.f32 %v498, %v498
          %v768 = vmul.f32 %v499, %v499
          %v769 = vmul.f32 %v500, %v500
          %v770 = vmul.f32 %v501, %v501
          %v771 = vmul.f32 %v502, %v502
          %v772 = vmul.f32 %v503, %v503
          %v773 = vmul.f32 %v504, %v504
          %v774 = vmul.f32 %v505, %v505
          %v775 = vmul.f32 %v506, %v506
          %v776 = vmul.f32 %v507, %v507
          %v777 = vmul.f32 %v508, %v508
          %v778 = vmul.f32 %v509, %v509
          %v779 = vmul.f32 %v510, %v510
          %v780 = vmul.f32 %v511, %v511
          %v781 = vmul.f32 %v512, %v512
          %v782 = vmul.f32 %v513, %v513
          %v783 = vmul.f32 %v514, %v514
          %v784 = vmul.f32 %v515, %v515
          %v785 = vmul.f32 %v516, %v516
          %v786 = vmul.f32 %v517, %v517
          %v787 = vmul.f32 %v518, %v518
          %v788 = vmul.f32 %v519, %v519
          %v789 = vmul.f32 %v520, %v520
          %v790 = vmul.f32 %v521, %v521
          %v791 = vmul.f32 %v522, %v522
          %v792 = vmul.f32 %v523, %v523
          %v793 = vmul.f32 %v524, %v524
          %v794 = vmul.f32 %v525, %v525
          %v795 = vmul.f32 %v526, %v526
          %v796 = vmul.f32 %v527, %v527
          %v797 = vmul.f32 %v528, %v528
          %v798 = vmul.f32 %v529, %v529
          %v799 = vmul.f32 %v530, %v530
          %v800 = vmul.f32 %v531, %v531
          %v801 = vmul.f32 %v532, %v532
          %v802 = vmul.f32 %v533, %v533
          %v803 = vmul.f32 %v534, %v534
          %v804 = vmul.f32 %v535, %v535
          %v805 = vmul.f32 %v536, %v536
          %v806 = vmul.f32 %v537, %v537
          %v807 = vmul.f32 %v538, %v538
          %v808 = vmul.f32 %v539, %v539
          %v809 = vmul.f32 %v540, %v540
          %v810 = vmul.f32 %v541, %v541
          %v811 = vmul.f32 %v542, %v542
          %v812 = vmul.f32 %v543, %v543
          %v813 = vmul.f32 %v544, %v544
          %v814 = vmul.f32 %v545, %v545
          %v815 = vmul.f32 %v546, %v546
          %v816 = vmul.f32 %v547, %v547
          %v817 = vmul.f32 %v548, %v548
          %v818 = vmul.f32 %v549, %v549
          %v819 = vmul.f32 %v550, %v550
          %v820 = vmul.f32 %v551, %v551
          %v821 = vmul.f32 %v552, %v552
          %v822 = vmul.f32 %v553, %v553
          %v823 = vmul.f32 %v554, %v554
          %v824 = vmul.f32 %v555, %v555
          %v825 = vmul.f32 %v556, %v556
          %v826 = vmul.f32 %v557, %v557
          %v827 = vmul.f32 %v558, %v558
          %v828 = vmul.f32 %v559, %v559
          %v829 = vmul.f32 %v701, %v701
          %v830 = vmul.f32 %v702, %v702
          %v831 = vmul.f32 %v703, %v703
          %v832 = vmul.f32 %v704, %v704
          %v833 = vmul.f32 %v705, %v705
          %v834 = vmul.f32 %v706, %v706
          %v835 = vmul.f32 %v707, %v707
          %v836 = vmul.f32 %v708, %v708
          %v837 = vmul.f32 %v709, %v709
          %v838 = vmul.f32 %v710, %v710
          %v839 = vmul.f32 %v711, %v711
          %v840 = vmul.f32 %v712, %v712
          %v841 = vmul.f32 %v713, %v713
          %v842 = vmul.f32 %v714, %v714
          %v843 = vmul.f32 %v715, %v715
          %v844 = vmul.f32 %v716, %v716
          %v845 = vmul.f32 %v717, %v717
          %v846 = vmul.f32 %v718, %v718
          %v847 = vmul.f32 %v719, %v719
          %v848 = vmul.f32 %v720, %v720
          %v849 = vmul.f32 %v721, %v721
          %v850 = vmul.f32 %v722, %v722
          %v851 = vmul.f32 %v723, %v723
          %v852 = vmul.f32 %v724, %v724
          %v853 = vmul.f32 %v725, %v725
          %v854 = vmul.f32 %v726, %v726
          %v855 = vmul.f32 %v727, %v727
          %v856 = vmul.f32 %v728, %v728
          %v857 = vmul.f32 %v729, %v729
          %v858 = vmul.f32 %v730, %v730
          %v859 = vmul.f32 %v731, %v731
          %v860 = vmul.f32 %v732, %v732
          %v861 = vmul.f32 %v733, %v733
          %v862 = vmul.f32 %v734, %v734
          %v863 = vmul.f32 %v735, %v735
          %v864 = vmul.f32 %v736, %v736
          %v865 = vmul.f32 %v737, %v737
          %v866 = vmul.f32 %v738, %v738
          %v867 = vmul.f32 %v739, %v739
          %v868 = vmul.f32 %v740, %v740
          %v869 = vmul.f32 %v741, %v741
          %v870 = vmul.f32 %v742, %v742
          %v871 = vmul.f32 %v743, %v743
          %v872 = vmul.f32 %v744, %v744
          %v873 = vmul.f32 %v745, %v745
          %v874 = vmul.f32 %v746, %v746
          %v875 = vmul.f32 %v747, %v747
          %v876 = vmul.f32 %v748, %v748
          %v877 = vmul.f32 %v749, %v749
          %v878 = vmul.f32 %v750, %v750
          %v879 = vmul.f32 %v751, %v751
          %v880 = vmul.f32 %v752, %v752
          %v881 = vmul.f32 %v753, %v753
          %v882 = vmul.f32 %v754, %v754
          %v883 = vmul.f32 %v755, %v755
          %v884 = vmul.f32 %v756, %v756
          %v885 = vmul.f32 %v757, %v757
          %v886 = vmul.f32 %v758, %v758
          %v887 = vmul.f32 %v759, %v759
          %v888 = vmul.f32 %v760, %v760
          %v889 = vmul.f32 %v761, %v761
          %v890 = vmul.f32 %v762, %v762
          %v891 = vmul.f32 %v763, %v763
          %v892 = vmul.f32 %v764, %v764
          %v893 = vadd.f32 %v765, %v829
          %v894 = vadd.f32 %v766, %v830
          %v895 = vadd.f32 %v767, %v831
          %v896 = vadd.f32 %v768, %v832
          %v897 = vadd.f32 %v769, %v833
          %v898 = vadd.f32 %v770, %v834
          %v899 = vadd.f32 %v771, %v835
          %v900 = vadd.f32 %v772, %v836
          %v901 = vadd.f32 %v773, %v837
          %v902 = vadd.f32 %v774, %v838
          %v903 = vadd.f32 %v775, %v839
          %v904 = vadd.f32 %v776, %v840
          %v905 = vadd.f32 %v777, %v841
          %v906 = vadd.f32 %v778, %v842
          %v907 = vadd.f32 %v779, %v843
          %v908 = vadd.f32 %v780, %v844
          %v909 = vadd.f32 %v781, %v845
          %v910 = vadd.f32 %v782, %v846
          %v911 = vadd.f32 %v783, %v847
          %v912 = vadd.f32 %v784, %v848
          %v913 = vadd.f32 %v785, %v849
          %v914 = vadd.f32 %v786, %v850
          %v915 = vadd.f32 %v787, %v851
          %v916 = vadd.f32 %v788, %v852
          %v917 = vadd.f32 %v789, %v853
          %v918 = vadd.f32 %v790, %v854
          %v919 = vadd.f32 %v791, %v855
          %v920 = vadd.f32 %v792, %v856
          %v921 = vadd.f32 %v793, %v857
          %v922 = vadd.f32 %v794, %v858
          %v923 = vadd.f32 %v795, %v859
          %v924 = vadd.f32 %v796, %v860
          %v925 = vadd.f32 %v797, %v861
          %v926 = vadd.f32 %v798, %v862
          %v927 = vadd.f32 %v799, %v863
          %v928 = vadd.f32 %v800, %v864
          %v929 = vadd.f32 %v801, %v865
          %v930 = vadd.f32 %v802, %v866
          %v931 = vadd.f32 %v803, %v867
          %v932 = vadd.f32 %v804, %v868
          %v933 = vadd.f32 %v805, %v869
          %v934 = vadd.f32 %v806, %v870
          %v935 = vadd.f32 %v807, %v871
          %v936 = vadd.f32 %v808, %v872
          %v937 = vadd.f32 %v809, %v873
          %v938 = vadd.f32 %v810, %v874
          %v939 = vadd.f32 %v811, %v875
          %v940 = vadd.f32 %v812, %v876
          %v941 = vadd.f32 %v813, %v877
          %v942 = vadd.f32 %v814, %v878
          %v943 = vadd.f32 %v815, %v879
          %v944 = vadd.f32 %v816, %v880
          %v945 = vadd.f32 %v817, %v881
          %v946 = vadd.f32 %v818, %v882
          %v947 = vadd.f32 %v819, %v883
          %v948 = vadd.f32 %v820, %v884
          %v949 = vadd.f32 %v821, %v885
          %v950 = vadd.f32 %v822, %v886
          %v951 = vadd.f32 %v823, %v887
          %v952 = vadd.f32 %v824, %v888
          %v953 = vadd.f32 %v825, %v889
          %v954 = vadd.f32 %v826, %v890
          %v955 = vadd.f32 %v827, %v891
          %v956 = vadd.f32 %v828, %v892
          %v957 = vld [vmem:[%s3] sm:$0xff]
          %v958 = vld [vmem:[%s3 + $0x8] sm:$0xff]
          %v959 = vld [vmem:[%s3 + $0x10] sm:$0xff]
          %v960 = vld [vmem:[%s3 + $0x18] sm:$0xff]
          %v961 = vld [vmem:[%s3 + $0x20] sm:$0xff]
          %v962 = vld [vmem:[%s3 + $0x28] sm:$0xff]
          %v963 = vld [vmem:[%s3 + $0x30] sm:$0xff]
          %v964 = vld [vmem:[%s3 + $0x38] sm:$0xff]
          %v965 = vld [vmem:[%s3 + $0x40] sm:$0xff]
          %v966 = vld [vmem:[%s3 + $0x48] sm:$0xff]
          %v967 = vld [vmem:[%s3 + $0x50] sm:$0xff]
          %v968 = vld [vmem:[%s3 + $0x58] sm:$0xff]
          %v969 = vld [vmem:[%s3 + $0x60] sm:$0xff]
          %v970 = vld [vmem:[%s3 + $0x68] sm:$0xff]
          %v971 = vld [vmem:[%s3 + $0x70] sm:$0xff]
          %v972 = vld [vmem:[%s3 + $0x78] sm:$0xff]
          %v973 = vld [vmem:[%s3 + $0x80] sm:$0xff]
          %v974 = vld [vmem:[%s3 + $0x88] sm:$0xff]
          %v975 = vld [vmem:[%s3 + $0x90] sm:$0xff]
          %v976 = vld [vmem:[%s3 + $0x98] sm:$0xff]
          %v977 = vld [vmem:[%s3 + $0xa0] sm:$0xff]
          %v978 = vld [vmem:[%s3 + $0xa8] sm:$0xff]
          %v979 = vld [vmem:[%s3 + $0xb0] sm:$0xff]
          %v980 = vld [vmem:[%s3 + $0xb8] sm:$0xff]
          %v981 = vld [vmem:[%s3 + $0xc0] sm:$0xff]
          %v982 = vld [vmem:[%s3 + $0xc8] sm:$0xff]
          %v983 = vld [vmem:[%s3 + $0xd0] sm:$0xff]
          %v984 = vld [vmem:[%s3 + $0xd8] sm:$0xff]
          %v985 = vld [vmem:[%s3 + $0xe0] sm:$0xff]
          %v986 = vld [vmem:[%s3 + $0xe8] sm:$0xff]
          %v987 = vld [vmem:[%s3 + $0xf0] sm:$0xff]
          %v988 = vld [vmem:[%s3 + $0xf8] sm:$0xff]
          %v989 = vld [vmem:[%s4] sm:$0x77]
          %v991 = vcombine.high %v989, %v989
          %vm992 = vcmask 23552
          %v994 = vsel %vm992, %v957, 0
          %v997 = vsel %vm992, %v958, 0
          %v1000 = vsel %vm992, %v959, 0
          %v1003 = vsel %vm992, %v960, 0
          %v1006 = vsel %vm992, %v961, 0
          %v1009 = vsel %vm992, %v962, 0
          %v1012 = vsel %vm992, %v963, 0
          %v1015 = vsel %vm992, %v964, 0
          %v1018 = vsel %vm992, %v965, 0
          %v1021 = vsel %vm992, %v966, 0
          %v1024 = vsel %vm992, %v967, 0
          %v1027 = vsel %vm992, %v968, 0
          %v1030 = vsel %vm992, %v969, 0
          %v1033 = vsel %vm992, %v970, 0
          %v1036 = vsel %vm992, %v971, 0
          %v1039 = vsel %vm992, %v972, 0
          %v1042 = vsel %vm992, %v973, 0
          %v1045 = vsel %vm992, %v974, 0
          %v1048 = vsel %vm992, %v975, 0
          %v1051 = vsel %vm992, %v976, 0
          %v1054 = vsel %vm992, %v977, 0
          %v1057 = vsel %vm992, %v978, 0
          %v1060 = vsel %vm992, %v979, 0
          %v1063 = vsel %vm992, %v980, 0
          %v1066 = vsel %vm992, %v981, 0
          %v1069 = vsel %vm992, %v982, 0
          %v1072 = vsel %vm992, %v983, 0
          %v1075 = vsel %vm992, %v984, 0
          %v1078 = vsel %vm992, %v985, 0
          %v1081 = vsel %vm992, %v986, 0
          %v1084 = vsel %vm992, %v987, 0
          %v1087 = vsel %vm992, %v988, 0
          %vm1089 = vcmask 1042432
          %v1090 = vsel %vm1089, %v989, 0
          %v1092 = vsel %vm1089, %v991, 0
          %1094 = vmatprep.subr.mxu0 %v1092
          %1095 = vmatpush1.msra.mxu0 %v1090
          %1096 = vmatprep.subr.mxu0 0.0
          %1097 = vmatpush1.msra.mxu0 0.0
          %1098 = vmatprep.subr.mxu0 0.0
          %1099 = vmatpush1.msra.mxu0 0.0
          %1100 = vmatprep.subr.mxu0 0.0
          %1101 = vmatpush1.msra.mxu0 0.0
          %1102 = vmatprep.subr.mxu0 0.0
          %1103 = vmatpush1.msra.mxu0 0.0
          %1104 = vmatprep.subr.mxu0 0.0
          %1105 = vmatpush1.msra.mxu0 0.0
          %1106 = vmatprep.subr.mxu0 0.0
          %1107 = vmatpush1.msra.mxu0 0.0
          %1108 = vmatprep.subr.mxu0 0.0
          %1109 = vmatpush1.msra.mxu0 0.0
          %1110 = vmatprep.subr.mxu0 0.0
          %1111 = vmatpush1.msra.mxu0 0.0
          %1112 = vmatprep.subr.mxu0 0.0
          %1113 = vmatpush1.msra.mxu0 0.0
          %1114 = vmatprep.subr.mxu0 0.0
          %1115 = vmatpush1.msra.mxu0 0.0
          %1116 = vmatprep.subr.mxu0 0.0
          %1117 = vmatpush1.msra.mxu0 0.0
          %1118 = vmatprep.subr.mxu0 0.0
          %1119 = vmatpush1.msra.mxu0 0.0
          %1120 = vmatprep.subr.mxu0 0.0
          %1121 = vmatpush1.msra.mxu0 0.0
          %1122 = vmatprep.subr.mxu0 0.0
          %1123 = vmatpush1.msra.mxu0 0.0
          %1124 = vmatprep.subr.mxu0 0.0
          %1125 = vmatpush1.msra.mxu0 0.0
          %1126 = vmatprep.subr.mxu0 0.0
          %1127 = vmatpush1.msra.mxu0 0.0
          %1128 = vmatprep.subr.mxu0 0.0
          %1129 = vmatpush1.msra.mxu0 0.0
          %1130 = vmatprep.subr.mxu0 0.0
          %1131 = vmatpush1.msra.mxu0 0.0
          %1132 = vmatprep.subr.mxu0 0.0
          %1133 = vmatpush1.msra.mxu0 0.0
          %1134 = vmatprep.subr.mxu0 0.0
          %1135 = vmatpush1.msra.mxu0 0.0
          %1136 = vmatprep.subr.mxu0 0.0
          %1137 = vmatpush1.msra.mxu0 0.0
          %1138 = vmatprep.subr.mxu0 0.0
          %1139 = vmatpush1.msra.mxu0 0.0
          %1140 = vmatprep.subr.mxu0 0.0
          %1141 = vmatpush1.msra.mxu0 0.0
          %1142 = vmatprep.subr.mxu0 0.0
          %1143 = vmatpush1.msra.mxu0 0.0
          %1144 = vmatprep.subr.mxu0 0.0
          %1145 = vmatpush1.msra.mxu0 0.0
          %1146 = vmatprep.subr.mxu0 0.0
          %1147 = vmatpush1.msra.mxu0 0.0
          %1148 = vmatprep.subr.mxu0 0.0
          %1149 = vmatpush1.msra.mxu0 0.0
          %1150 = vmatprep.subr.mxu0 0.0
          %1151 = vmatpush1.msra.mxu0 0.0
          %1152 = vmatprep.subr.mxu0 0.0
          %1153 = vmatpush1.msra.mxu0 0.0
          %1154 = vmatprep.subr.mxu0 0.0
          %1155 = vmatpush1.msra.mxu0 0.0
          %1156 = vmatprep.subr.mxu0 0.0
          %1157 = vmatpush1.msra.mxu0 0.0
          %1158 = vmatprep.mubr.f32.mxu0 0.0
          %1159 = vmatmul.mubr.f32.gmra.mrb[0].mxu0 %v994
          %v1160 = vpop.f32.mrb[0].mxu0
          %v1161 = vadd.f32 0.0, %v1160
          %v1162 = vpop.f32.mrb[0].mxu0
          %v1163 = vadd.f32 0.0, %v1162
          %1164 = vmatprep.mubr.f32.mxu0 0.0
          %1165 = vmatmul.mubr.f32.gmra.mrb[0].mxu0 %v997
          %v1166 = vpop.f32.mrb[0].mxu0
          %v1167 = vadd.f32 0.0, %v1166
          %v1168 = vpop.f32.mrb[0].mxu0
          %v1169 = vadd.f32 0.0, %v1168
          %1170 = vmatprep.mubr.f32.mxu0 0.0
          %1171 = vmatmul.mubr.f32.gmra.mrb[0].mxu0 %v1000
          %v1172 = vpop.f32.mrb[0].mxu0
          %v1173 = vadd.f32 0.0, %v1172
          %v1174 = vpop.f32.mrb[0].mxu0
          %v1175 = vadd.f32 0.0, %v1174
          %1176 = vmatprep.mubr.f32.mxu0 0.0
          %1177 = vmatmul.mubr.f32.gmra.mrb[0].mxu0 %v1003
          %v1178 = vpop.f32.mrb[0].mxu0
          %v1179 = vadd.f32 0.0, %v1178
          %v1180 = vpop.f32.mrb[0].mxu0
          %v1181 = vadd.f32 0.0, %v1180
          %1182 = vmatprep.mubr.f32.mxu0 0.0
          %1183 = vmatmul.mubr.f32.gmra.mrb[0].mxu0 %v1006
          %v1184 = vpop.f32.mrb[0].mxu0
          %v1185 = vadd.f32 0.0, %v1184
          %v1186 = vpop.f32.mrb[0].mxu0
          %v1187 = vadd.f32 0.0, %v1186
          %1188 = vmatprep.mubr.f32.mxu0 0.0
          %1189 = vmatmul.mubr.f32.gmra.mrb[0].mxu0 %v1009
          %v1190 = vpop.f32.mrb[0].mxu0
          %v1191 = vadd.f32 0.0, %v1190
          %v1192 = vpop.f32.mrb[0].mxu0
          %v1193 = vadd.f32 0.0, %v1192
          %1194 = vmatprep.mubr.f32.mxu0 0.0
          %1195 = vmatmul.mubr.f32.gmra.mrb[0].mxu0 %v1012
          %v1196 = vpop.f32.mrb[0].mxu0
          %v1197 = vadd.f32 0.0, %v1196
          %v1198 = vpop.f32.mrb[0].mxu0
          %v1199 = vadd.f32 0.0, %v1198
          %1200 = vmatprep.mubr.f32.mxu0 0.0
          %1201 = vmatmul.mubr.f32.gmra.mrb[0].mxu0 %v1015
          %v1202 = vpop.f32.mrb[0].mxu0
          %v1203 = vadd.f32 0.0, %v1202
          %v1204 = vpop.f32.mrb[0].mxu0
          %v1205 = vadd.f32 0.0, %v1204
          %1206 = vmatprep.mubr.f32.mxu0 0.0
          %1207 = vmatmul.mubr.f32.gmra.mrb[0].mxu0 %v1018
          %v1208 = vpop.f32.mrb[0].mxu0
          %v1209 = vadd.f32 0.0, %v1208
          %v1210 = vpop.f32.mrb[0].mxu0
          %v1211 = vadd.f32 0.0, %v1210
          %1212 = vmatprep.mubr.f32.mxu0 0.0
          %1213 = vmatmul.mubr.f32.gmra.mrb[0].mxu0 %v1021
          %v1214 = vpop.f32.mrb[0].mxu0
          %v1215 = vadd.f32 0.0, %v1214
          %v1216 = vpop.f32.mrb[0].mxu0
          %v1217 = vadd.f32 0.0, %v1216
          %1218 = vmatprep.mubr.f32.mxu0 0.0
          %1219 = vmatmul.mubr.f32.gmra.mrb[0].mxu0 %v1024
          %v1220 = vpop.f32.mrb[0].mxu0
          %v1221 = vadd.f32 0.0, %v1220
          %v1222 = vpop.f32.mrb[0].mxu0
          %v1223 = vadd.f32 0.0, %v1222
          %1224 = vmatprep.mubr.f32.mxu0 0.0
          %1225 = vmatmul.mubr.f32.gmra.mrb[0].mxu0 %v1027
          %v1226 = vpop.f32.mrb[0].mxu0
          %v1227 = vadd.f32 0.0, %v1226
          %v1228 = vpop.f32.mrb[0].mxu0
          %v1229 = vadd.f32 0.0, %v1228
          %1230 = vmatprep.mubr.f32.mxu0 0.0
          %1231 = vmatmul.mubr.f32.gmra.mrb[0].mxu0 %v1030
          %v1232 = vpop.f32.mrb[0].mxu0
          %v1233 = vadd.f32 0.0, %v1232
          %v1234 = vpop.f32.mrb[0].mxu0
          %v1235 = vadd.f32 0.0, %v1234
          %1236 = vmatprep.mubr.f32.mxu0 0.0
          %1237 = vmatmul.mubr.f32.gmra.mrb[0].mxu0 %v1033
          %v1238 = vpop.f32.mrb[0].mxu0
          %v1239 = vadd.f32 0.0, %v1238
          %v1240 = vpop.f32.mrb[0].mxu0
          %v1241 = vadd.f32 0.0, %v1240
          %1242 = vmatprep.mubr.f32.mxu0 0.0
          %1243 = vmatmul.mubr.f32.gmra.mrb[0].mxu0 %v1036
          %v1244 = vpop.f32.mrb[0].mxu0
          %v1245 = vadd.f32 0.0, %v1244
          %v1246 = vpop.f32.mrb[0].mxu0
          %v1247 = vadd.f32 0.0, %v1246
          %1248 = vmatprep.mubr.f32.mxu0 0.0
          %1249 = vmatmul.mubr.f32.gmra.mrb[0].mxu0 %v1039
          %v1250 = vpop.f32.mrb[0].mxu0
          %v1251 = vadd.f32 0.0, %v1250
          %v1252 = vpop.f32.mrb[0].mxu0
          %v1253 = vadd.f32 0.0, %v1252
          %1254 = vmatprep.mubr.f32.mxu0 0.0
          %1255 = vmatmul.mubr.f32.gmra.mrb[0].mxu0 %v1042
          %v1256 = vpop.f32.mrb[0].mxu0
          %v1257 = vadd.f32 0.0, %v1256
          %v1258 = vpop.f32.mrb[0].mxu0
          %v1259 = vadd.f32 0.0, %v1258
          %1260 = vmatprep.mubr.f32.mxu0 0.0
          %1261 = vmatmul.mubr.f32.gmra.mrb[0].mxu0 %v1045
          %v1262 = vpop.f32.mrb[0].mxu0
          %v1263 = vadd.f32 0.0, %v1262
          %v1264 = vpop.f32.mrb[0].mxu0
          %v1265 = vadd.f32 0.0, %v1264
          %1266 = vmatprep.mubr.f32.mxu0 0.0
          %1267 = vmatmul.mubr.f32.gmra.mrb[0].mxu0 %v1048
          %v1268 = vpop.f32.mrb[0].mxu0
          %v1269 = vadd.f32 0.0, %v1268
          %v1270 = vpop.f32.mrb[0].mxu0
          %v1271 = vadd.f32 0.0, %v1270
          %1272 = vmatprep.mubr.f32.mxu0 0.0
          %1273 = vmatmul.mubr.f32.gmra.mrb[0].mxu0 %v1051
          %v1274 = vpop.f32.mrb[0].mxu0
          %v1275 = vadd.f32 0.0, %v1274
          %v1276 = vpop.f32.mrb[0].mxu0
          %v1277 = vadd.f32 0.0, %v1276
          %1278 = vmatprep.mubr.f32.mxu0 0.0
          %1279 = vmatmul.mubr.f32.gmra.mrb[0].mxu0 %v1054
          %v1280 = vpop.f32.mrb[0].mxu0
          %v1281 = vadd.f32 0.0, %v1280
          %v1282 = vpop.f32.mrb[0].mxu0
          %v1283 = vadd.f32 0.0, %v1282
          %1284 = vmatprep.mubr.f32.mxu0 0.0
          %1285 = vmatmul.mubr.f32.gmra.mrb[0].mxu0 %v1057
          %v1286 = vpop.f32.mrb[0].mxu0
          %v1287 = vadd.f32 0.0, %v1286
          %v1288 = vpop.f32.mrb[0].mxu0
          %v1289 = vadd.f32 0.0, %v1288
          %1290 = vmatprep.mubr.f32.mxu0 0.0
          %1291 = vmatmul.mubr.f32.gmra.mrb[0].mxu0 %v1060
          %v1292 = vpop.f32.mrb[0].mxu0
          %v1293 = vadd.f32 0.0, %v1292
          %v1294 = vpop.f32.mrb[0].mxu0
          %v1295 = vadd.f32 0.0, %v1294
          %1296 = vmatprep.mubr.f32.mxu0 0.0
          %1297 = vmatmul.mubr.f32.gmra.mrb[0].mxu0 %v1063
          %v1298 = vpop.f32.mrb[0].mxu0
          %v1299 = vadd.f32 0.0, %v1298
          %v1300 = vpop.f32.mrb[0].mxu0
          %v1301 = vadd.f32 0.0, %v1300
          %1302 = vmatprep.mubr.f32.mxu0 0.0
          %1303 = vmatmul.mubr.f32.gmra.mrb[0].mxu0 %v1066
          %v1304 = vpop.f32.mrb[0].mxu0
          %v1305 = vadd.f32 0.0, %v1304
          %v1306 = vpop.f32.mrb[0].mxu0
          %v1307 = vadd.f32 0.0, %v1306
          %1308 = vmatprep.mubr.f32.mxu0 0.0
          %1309 = vmatmul.mubr.f32.gmra.mrb[0].mxu0 %v1069
          %v1310 = vpop.f32.mrb[0].mxu0
          %v1311 = vadd.f32 0.0, %v1310
          %v1312 = vpop.f32.mrb[0].mxu0
          %v1313 = vadd.f32 0.0, %v1312
          %1314 = vmatprep.mubr.f32.mxu0 0.0
          %1315 = vmatmul.mubr.f32.gmra.mrb[0].mxu0 %v1072
          %v1316 = vpop.f32.mrb[0].mxu0
          %v1317 = vadd.f32 0.0, %v1316
          %v1318 = vpop.f32.mrb[0].mxu0
          %v1319 = vadd.f32 0.0, %v1318
          %1320 = vmatprep.mubr.f32.mxu0 0.0
          %1321 = vmatmul.mubr.f32.gmra.mrb[0].mxu0 %v1075
          %v1322 = vpop.f32.mrb[0].mxu0
          %v1323 = vadd.f32 0.0, %v1322
          %v1324 = vpop.f32.mrb[0].mxu0
          %v1325 = vadd.f32 0.0, %v1324
          %1326 = vmatprep.mubr.f32.mxu0 0.0
          %1327 = vmatmul.mubr.f32.gmra.mrb[0].mxu0 %v1078
          %v1328 = vpop.f32.mrb[0].mxu0
          %v1329 = vadd.f32 0.0, %v1328
          %v1330 = vpop.f32.mrb[0].mxu0
          %v1331 = vadd.f32 0.0, %v1330
          %1332 = vmatprep.mubr.f32.mxu0 0.0
          %1333 = vmatmul.mubr.f32.gmra.mrb[0].mxu0 %v1081
          %v1334 = vpop.f32.mrb[0].mxu0
          %v1335 = vadd.f32 0.0, %v1334
          %v1336 = vpop.f32.mrb[0].mxu0
          %v1337 = vadd.f32 0.0, %v1336
          %1338 = vmatprep.mubr.f32.mxu0 0.0
          %1339 = vmatmul.mubr.f32.gmra.mrb[0].mxu0 %v1084
          %v1340 = vpop.f32.mrb[0].mxu0
          %v1341 = vadd.f32 0.0, %v1340
          %v1342 = vpop.f32.mrb[0].mxu0
          %v1343 = vadd.f32 0.0, %v1342
          %1344 = vmatprep.mubr.f32.mxu0 0.0
          %1345 = vmatmul.mubr.f32.gmra.mrb[0].mxu0 %v1087
          %v1346 = vpop.f32.mrb[0].mxu0
          %v1347 = vadd.f32 0.0, %v1346
          %v1348 = vpop.f32.mrb[0].mxu0
          %v1349 = vadd.f32 0.0, %v1348
          %1350 = vdwg.mxu0
          %v1351 = vstv %s290
          %v1352 = vmul.f32 %v893, %v1351
          %v1353 = vmul.f32 %v894, %v1351
          %v1354 = vmul.f32 %v895, %v1351
          %v1355 = vmul.f32 %v896, %v1351
          %v1356 = vmul.f32 %v897, %v1351
          %v1357 = vmul.f32 %v898, %v1351
          %v1358 = vmul.f32 %v899, %v1351
          %v1359 = vmul.f32 %v900, %v1351
          %v1360 = vmul.f32 %v901, %v1351
          %v1361 = vmul.f32 %v902, %v1351
          %v1362 = vmul.f32 %v903, %v1351
          %v1363 = vmul.f32 %v904, %v1351
          %v1364 = vmul.f32 %v905, %v1351
          %v1365 = vmul.f32 %v906, %v1351
          %v1366 = vmul.f32 %v907, %v1351
          %v1367 = vmul.f32 %v908, %v1351
          %v1368 = vmul.f32 %v909, %v1351
          %v1369 = vmul.f32 %v910, %v1351
          %v1370 = vmul.f32 %v911, %v1351
          %v1371 = vmul.f32 %v912, %v1351
          %v1372 = vmul.f32 %v913, %v1351
          %v1373 = vmul.f32 %v914, %v1351
          %v1374 = vmul.f32 %v915, %v1351
          %v1375 = vmul.f32 %v916, %v1351
          %v1376 = vmul.f32 %v917, %v1351
          %v1377 = vmul.f32 %v918, %v1351
          %v1378 = vmul.f32 %v919, %v1351
          %v1379 = vmul.f32 %v920, %v1351
          %v1380 = vmul.f32 %v921, %v1351
          %v1381 = vmul.f32 %v922, %v1351
          %v1382 = vmul.f32 %v923, %v1351
          %v1383 = vmul.f32 %v924, %v1351
          %v1384 = vmul.f32 %v925, %v1351
          %v1385 = vmul.f32 %v926, %v1351
          %v1386 = vmul.f32 %v927, %v1351
          %v1387 = vmul.f32 %v928, %v1351
          %v1388 = vmul.f32 %v929, %v1351
          %v1389 = vmul.f32 %v930, %v1351
          %v1390 = vmul.f32 %v931, %v1351
          %v1391 = vmul.f32 %v932, %v1351
          %v1392 = vmul.f32 %v933, %v1351
          %v1393 = vmul.f32 %v934, %v1351
          %v1394 = vmul.f32 %v935, %v1351
          %v1395 = vmul.f32 %v936, %v1351
          %v1396 = vmul.f32 %v937, %v1351
          %v1397 = vmul.f32 %v938, %v1351
          %v1398 = vmul.f32 %v939, %v1351
          %v1399 = vmul.f32 %v940, %v1351
          %v1400 = vmul.f32 %v941, %v1351
          %v1401 = vmul.f32 %v942, %v1351
          %v1402 = vmul.f32 %v943, %v1351
          %v1403 = vmul.f32 %v944, %v1351
          %v1404 = vmul.f32 %v945, %v1351
          %v1405 = vmul.f32 %v946, %v1351
          %v1406 = vmul.f32 %v947, %v1351
          %v1407 = vmul.f32 %v948, %v1351
          %v1408 = vmul.f32 %v949, %v1351
          %v1409 = vmul.f32 %v950, %v1351
          %v1410 = vmul.f32 %v951, %v1351
          %v1411 = vmul.f32 %v952, %v1351
          %v1412 = vmul.f32 %v953, %v1351
          %v1413 = vmul.f32 %v954, %v1351
          %v1414 = vmul.f32 %v955, %v1351
          %v1415 = vmul.f32 %v956, %v1351
          %v1416 = vsub.f32 1.0, %v1161
          %v1417 = vsub.f32 1.0, %v1163
          %v1418 = vsub.f32 1.0, %v1167
          %v1419 = vsub.f32 1.0, %v1169
          %v1420 = vsub.f32 1.0, %v1173
          %v1421 = vsub.f32 1.0, %v1175
          %v1422 = vsub.f32 1.0, %v1179
          %v1423 = vsub.f32 1.0, %v1181
          %v1424 = vsub.f32 1.0, %v1185
          %v1425 = vsub.f32 1.0, %v1187
          %v1426 = vsub.f32 1.0, %v1191
          %v1427 = vsub.f32 1.0, %v1193
          %v1428 = vsub.f32 1.0, %v1197
          %v1429 = vsub.f32 1.0, %v1199
          %v1430 = vsub.f32 1.0, %v1203
          %v1431 = vsub.f32 1.0, %v1205
          %v1432 = vsub.f32 1.0, %v1209
          %v1433 = vsub.f32 1.0, %v1211
          %v1434 = vsub.f32 1.0, %v1215
          %v1435 = vsub.f32 1.0, %v1217
          %v1436 = vsub.f32 1.0, %v1221
          %v1437 = vsub.f32 1.0, %v1223
          %v1438 = vsub.f32 1.0, %v1227
          %v1439 = vsub.f32 1.0, %v1229
          %v1440 = vsub.f32 1.0, %v1233
          %v1441 = vsub.f32 1.0, %v1235
          %v1442 = vsub.f32 1.0, %v1239
          %v1443 = vsub.f32 1.0, %v1241
          %v1444 = vsub.f32 1.0, %v1245
          %v1445 = vsub.f32 1.0, %v1247
          %v1446 = vsub.f32 1.0, %v1251
          %v1447 = vsub.f32 1.0, %v1253
          %v1448 = vsub.f32 1.0, %v1257
          %v1449 = vsub.f32 1.0, %v1259
          %v1450 = vsub.f32 1.0, %v1263
          %v1451 = vsub.f32 1.0, %v1265
          %v1452 = vsub.f32 1.0, %v1269
          %v1453 = vsub.f32 1.0, %v1271
          %v1454 = vsub.f32 1.0, %v1275
          %v1455 = vsub.f32 1.0, %v1277
          %v1456 = vsub.f32 1.0, %v1281
          %v1457 = vsub.f32 1.0, %v1283
          %v1458 = vsub.f32 1.0, %v1287
          %v1459 = vsub.f32 1.0, %v1289
          %v1460 = vsub.f32 1.0, %v1293
          %v1461 = vsub.f32 1.0, %v1295
          %v1462 = vsub.f32 1.0, %v1299
          %v1463 = vsub.f32 1.0, %v1301
          %v1464 = vsub.f32 1.0, %v1305
          %v1465 = vsub.f32 1.0, %v1307
          %v1466 = vsub.f32 1.0, %v1311
          %v1467 = vsub.f32 1.0, %v1313
          %v1468 = vsub.f32 1.0, %v1317
          %v1469 = vsub.f32 1.0, %v1319
          %v1470 = vsub.f32 1.0, %v1323
          %v1471 = vsub.f32 1.0, %v1325
          %v1472 = vsub.f32 1.0, %v1329
          %v1473 = vsub.f32 1.0, %v1331
          %v1474 = vsub.f32 1.0, %v1335
          %v1475 = vsub.f32 1.0, %v1337
          %v1476 = vsub.f32 1.0, %v1341
          %v1477 = vsub.f32 1.0, %v1343
          %v1478 = vsub.f32 1.0, %v1347
          %v1479 = vsub.f32 1.0, %v1349
          %v1480 = vstv %s291
          %v1481 = vmul.f32 %v1416, %v1480
          %v1482 = vmul.f32 %v1417, %v1480
          %v1483 = vmul.f32 %v1418, %v1480
          %v1484 = vmul.f32 %v1419, %v1480
          %v1485 = vmul.f32 %v1420, %v1480
          %v1486 = vmul.f32 %v1421, %v1480
          %v1487 = vmul.f32 %v1422, %v1480
          %v1488 = vmul.f32 %v1423, %v1480
          %v1489 = vmul.f32 %v1424, %v1480
          %v1490 = vmul.f32 %v1425, %v1480
          %v1491 = vmul.f32 %v1426, %v1480
          %v1492 = vmul.f32 %v1427, %v1480
          %v1493 = vmul.f32 %v1428, %v1480
          %v1494 = vmul.f32 %v1429, %v1480
          %v1495 = vmul.f32 %v1430, %v1480
          %v1496 = vmul.f32 %v1431, %v1480
          %v1497 = vmul.f32 %v1432, %v1480
          %v1498 = vmul.f32 %v1433, %v1480
          %v1499 = vmul.f32 %v1434, %v1480
          %v1500 = vmul.f32 %v1435, %v1480
          %v1501 = vmul.f32 %v1436, %v1480
          %v1502 = vmul.f32 %v1437, %v1480
          %v1503 = vmul.f32 %v1438, %v1480
          %v1504 = vmul.f32 %v1439, %v1480
          %v1505 = vmul.f32 %v1440, %v1480
          %v1506 = vmul.f32 %v1441, %v1480
          %v1507 = vmul.f32 %v1442, %v1480
          %v1508 = vmul.f32 %v1443, %v1480
          %v1509 = vmul.f32 %v1444, %v1480
          %v1510 = vmul.f32 %v1445, %v1480
          %v1511 = vmul.f32 %v1446, %v1480
          %v1512 = vmul.f32 %v1447, %v1480
          %v1513 = vmul.f32 %v1448, %v1480
          %v1514 = vmul.f32 %v1449, %v1480
          %v1515 = vmul.f32 %v1450, %v1480
          %v1516 = vmul.f32 %v1451, %v1480
          %v1517 = vmul.f32 %v1452, %v1480
          %v1518 = vmul.f32 %v1453, %v1480
          %v1519 = vmul.f32 %v1454, %v1480
          %v1520 = vmul.f32 %v1455, %v1480
          %v1521 = vmul.f32 %v1456, %v1480
          %v1522 = vmul.f32 %v1457, %v1480
          %v1523 = vmul.f32 %v1458, %v1480
          %v1524 = vmul.f32 %v1459, %v1480
          %v1525 = vmul.f32 %v1460, %v1480
          %v1526 = vmul.f32 %v1461, %v1480
          %v1527 = vmul.f32 %v1462, %v1480
          %v1528 = vmul.f32 %v1463, %v1480
          %v1529 = vmul.f32 %v1464, %v1480
          %v1530 = vmul.f32 %v1465, %v1480
          %v1531 = vmul.f32 %v1466, %v1480
          %v1532 = vmul.f32 %v1467, %v1480
          %v1533 = vmul.f32 %v1468, %v1480
          %v1534 = vmul.f32 %v1469, %v1480
          %v1535 = vmul.f32 %v1470, %v1480
          %v1536 = vmul.f32 %v1471, %v1480
          %v1537 = vmul.f32 %v1472, %v1480
          %v1538 = vmul.f32 %v1473, %v1480
          %v1539 = vmul.f32 %v1474, %v1480
          %v1540 = vmul.f32 %v1475, %v1480
          %v1541 = vmul.f32 %v1476, %v1480
          %v1542 = vmul.f32 %v1477, %v1480
          %v1543 = vmul.f32 %v1478, %v1480
          %v1544 = vmul.f32 %v1479, %v1480
          %v1545 = vadd.f32 %v1352, %v1481
          %v1546 = vadd.f32 %v1353, %v1482
          %v1547 = vadd.f32 %v1354, %v1483
          %v1548 = vadd.f32 %v1355, %v1484
          %v1549 = vadd.f32 %v1356, %v1485
          %v1550 = vadd.f32 %v1357, %v1486
          %v1551 = vadd.f32 %v1358, %v1487
          %v1552 = vadd.f32 %v1359, %v1488
          %v1553 = vadd.f32 %v1360, %v1489
          %v1554 = vadd.f32 %v1361, %v1490
          %v1555 = vadd.f32 %v1362, %v1491
          %v1556 = vadd.f32 %v1363, %v1492
          %v1557 = vadd.f32 %v1364, %v1493
          %v1558 = vadd.f32 %v1365, %v1494
          %v1559 = vadd.f32 %v1366, %v1495
          %v1560 = vadd.f32 %v1367, %v1496
          %v1561 = vadd.f32 %v1368, %v1497
          %v1562 = vadd.f32 %v1369, %v1498
          %v1563 = vadd.f32 %v1370, %v1499
          %v1564 = vadd.f32 %v1371, %v1500
          %v1565 = vadd.f32 %v1372, %v1501
          %v1566 = vadd.f32 %v1373, %v1502
          %v1567 = vadd.f32 %v1374, %v1503
          %v1568 = vadd.f32 %v1375, %v1504
          %v1569 = vadd.f32 %v1376, %v1505
          %v1570 = vadd.f32 %v1377, %v1506
          %v1571 = vadd.f32 %v1378, %v1507
          %v1572 = vadd.f32 %v1379, %v1508
          %v1573 = vadd.f32 %v1380, %v1509
          %v1574 = vadd.f32 %v1381, %v1510
          %v1575 = vadd.f32 %v1382, %v1511
          %v1576 = vadd.f32 %v1383, %v1512
          %v1577 = vadd.f32 %v1384, %v1513
          %v1578 = vadd.f32 %v1385, %v1514
          %v1579 = vadd.f32 %v1386, %v1515
          %v1580 = vadd.f32 %v1387, %v1516
          %v1581 = vadd.f32 %v1388, %v1517
          %v1582 = vadd.f32 %v1389, %v1518
          %v1583 = vadd.f32 %v1390, %v1519
          %v1584 = vadd.f32 %v1391, %v1520
          %v1585 = vadd.f32 %v1392, %v1521
          %v1586 = vadd.f32 %v1393, %v1522
          %v1587 = vadd.f32 %v1394, %v1523
          %v1588 = vadd.f32 %v1395, %v1524
          %v1589 = vadd.f32 %v1396, %v1525
          %v1590 = vadd.f32 %v1397, %v1526
          %v1591 = vadd.f32 %v1398, %v1527
          %v1592 = vadd.f32 %v1399, %v1528
          %v1593 = vadd.f32 %v1400, %v1529
          %v1594 = vadd.f32 %v1401, %v1530
          %v1595 = vadd.f32 %v1402, %v1531
          %v1596 = vadd.f32 %v1403, %v1532
          %v1597 = vadd.f32 %v1404, %v1533
          %v1598 = vadd.f32 %v1405, %v1534
          %v1599 = vadd.f32 %v1406, %v1535
          %v1600 = vadd.f32 %v1407, %v1536
          %v1601 = vadd.f32 %v1408, %v1537
          %v1602 = vadd.f32 %v1409, %v1538
          %v1603 = vadd.f32 %v1410, %v1539
          %v1604 = vadd.f32 %v1411, %v1540
          %v1605 = vadd.f32 %v1412, %v1541
          %v1606 = vadd.f32 %v1413, %v1542
          %v1607 = vadd.f32 %v1414, %v1543
          %v1608 = vadd.f32 %v1415, %v1544
          %v1609 = vsub.f32 0.0, %v1545
          %v1610 = vsub.f32 0.0, %v1546
          %v1611 = vsub.f32 0.0, %v1547
          %v1612 = vsub.f32 0.0, %v1548
          %v1613 = vsub.f32 0.0, %v1549
          %v1614 = vsub.f32 0.0, %v1550
          %v1615 = vsub.f32 0.0, %v1551
          %v1616 = vsub.f32 0.0, %v1552
          %v1617 = vsub.f32 0.0, %v1553
          %v1618 = vsub.f32 0.0, %v1554
          %v1619 = vsub.f32 0.0, %v1555
          %v1620 = vsub.f32 0.0, %v1556
          %v1621 = vsub.f32 0.0, %v1557
          %v1622 = vsub.f32 0.0, %v1558
          %v1623 = vsub.f32 0.0, %v1559
          %v1624 = vsub.f32 0.0, %v1560
          %v1625 = vsub.f32 0.0, %v1561
          %v1626 = vsub.f32 0.0, %v1562
          %v1627 = vsub.f32 0.0, %v1563
          %v1628 = vsub.f32 0.0, %v1564
          %v1629 = vsub.f32 0.0, %v1565
          %v1630 = vsub.f32 0.0, %v1566
          %v1631 = vsub.f32 0.0, %v1567
          %v1632 = vsub.f32 0.0, %v1568
          %v1633 = vsub.f32 0.0, %v1569
          %v1634 = vsub.f32 0.0, %v1570
          %v1635 = vsub.f32 0.0, %v1571
          %v1636 = vsub.f32 0.0, %v1572
          %v1637 = vsub.f32 0.0, %v1573
          %v1638 = vsub.f32 0.0, %v1574
          %v1639 = vsub.f32 0.0, %v1575
          %v1640 = vsub.f32 0.0, %v1576
          %v1641 = vsub.f32 0.0, %v1577
          %v1642 = vsub.f32 0.0, %v1578
          %v1643 = vsub.f32 0.0, %v1579
          %v1644 = vsub.f32 0.0, %v1580
          %v1645 = vsub.f32 0.0, %v1581
          %v1646 = vsub.f32 0.0, %v1582
          %v1647 = vsub.f32 0.0, %v1583
          %v1648 = vsub.f32 0.0, %v1584
          %v1649 = vsub.f32 0.0, %v1585
          %v1650 = vsub.f32 0.0, %v1586
          %v1651 = vsub.f32 0.0, %v1587
          %v1652 = vsub.f32 0.0, %v1588
          %v1653 = vsub.f32 0.0, %v1589
          %v1654 = vsub.f32 0.0, %v1590
          %v1655 = vsub.f32 0.0, %v1591
          %v1656 = vsub.f32 0.0, %v1592
          %v1657 = vsub.f32 0.0, %v1593
          %v1658 = vsub.f32 0.0, %v1594
          %v1659 = vsub.f32 0.0, %v1595
          %v1660 = vsub.f32 0.0, %v1596
          %v1661 = vsub.f32 0.0, %v1597
          %v1662 = vsub.f32 0.0, %v1598
          %v1663 = vsub.f32 0.0, %v1599
          %v1664 = vsub.f32 0.0, %v1600
          %v1665 = vsub.f32 0.0, %v1601
          %v1666 = vsub.f32 0.0, %v1602
          %v1667 = vsub.f32 0.0, %v1603
          %v1668 = vsub.f32 0.0, %v1604
          %v1669 = vsub.f32 0.0, %v1605
          %v1670 = vsub.f32 0.0, %v1606
          %v1671 = vsub.f32 0.0, %v1607
          %v1672 = vsub.f32 0.0, %v1608
          %v1673 = vmul.f32 %v1609, 1.442695
          %v1674 = vpow.pop %v1673
          %v1675 = vmul.f32 %v1610, 1.442695
          %v1676 = vpow.pop %v1675
          %v1677 = vmul.f32 %v1611, 1.442695
          %v1678 = vpow.pop %v1677
          %v1679 = vmul.f32 %v1612, 1.442695
          %v1680 = vpow.pop %v1679
          %v1681 = vmul.f32 %v1613, 1.442695
          %v1682 = vpow.pop %v1681
          %v1683 = vmul.f32 %v1614, 1.442695
          %v1684 = vpow.pop %v1683
          %v1685 = vmul.f32 %v1615, 1.442695
          %v1686 = vpow.pop %v1685
          %v1687 = vmul.f32 %v1616, 1.442695
          %v1688 = vpow.pop %v1687
          %v1689 = vmul.f32 %v1617, 1.442695
          %v1690 = vpow.pop %v1689
          %v1691 = vmul.f32 %v1618, 1.442695
          %v1692 = vpow.pop %v1691
          %v1693 = vmul.f32 %v1619, 1.442695
          %v1694 = vpow.pop %v1693
          %v1695 = vmul.f32 %v1620, 1.442695
          %v1696 = vpow.pop %v1695
          %v1697 = vmul.f32 %v1621, 1.442695
          %v1698 = vpow.pop %v1697
          %v1699 = vmul.f32 %v1622, 1.442695
          %v1700 = vpow.pop %v1699
          %v1701 = vmul.f32 %v1623, 1.442695
          %v1702 = vpow.pop %v1701
          %v1703 = vmul.f32 %v1624, 1.442695
          %v1704 = vpow.pop %v1703
          %v1705 = vmul.f32 %v1625, 1.442695
          %v1706 = vpow.pop %v1705
          %v1707 = vmul.f32 %v1626, 1.442695
          %v1708 = vpow.pop %v1707
          %v1709 = vmul.f32 %v1627, 1.442695
          %v1710 = vpow.pop %v1709
          %v1711 = vmul.f32 %v1628, 1.442695
          %v1712 = vpow.pop %v1711
          %v1713 = vmul.f32 %v1629, 1.442695
          %v1714 = vpow.pop %v1713
          %v1715 = vmul.f32 %v1630, 1.442695
          %v1716 = vpow.pop %v1715
          %v1717 = vmul.f32 %v1631, 1.442695
          %v1718 = vpow.pop %v1717
          %v1719 = vmul.f32 %v1632, 1.442695
          %v1720 = vpow.pop %v1719
          %v1721 = vmul.f32 %v1633, 1.442695
          %v1722 = vpow.pop %v1721
          %v1723 = vmul.f32 %v1634, 1.442695
          %v1724 = vpow.pop %v1723
          %v1725 = vmul.f32 %v1635, 1.442695
          %v1726 = vpow.pop %v1725
          %v1727 = vmul.f32 %v1636, 1.442695
          %v1728 = vpow.pop %v1727
          %v1729 = vmul.f32 %v1637, 1.442695
          %v1730 = vpow.pop %v1729
          %v1731 = vmul.f32 %v1638, 1.442695
          %v1732 = vpow.pop %v1731
          %v1733 = vmul.f32 %v1639, 1.442695
          %v1734 = vpow.pop %v1733
          %v1735 = vmul.f32 %v1640, 1.442695
          %v1736 = vpow.pop %v1735
          %v1737 = vmul.f32 %v1641, 1.442695
          %v1738 = vpow.pop %v1737
          %v1739 = vmul.f32 %v1642, 1.442695
          %v1740 = vpow.pop %v1739
          %v1741 = vmul.f32 %v1643, 1.442695
          %v1742 = vpow.pop %v1741
          %v1743 = vmul.f32 %v1644, 1.442695
          %v1744 = vpow.pop %v1743
          %v1745 = vmul.f32 %v1645, 1.442695
          %v1746 = vpow.pop %v1745
          %v1747 = vmul.f32 %v1646, 1.442695
          %v1748 = vpow.pop %v1747
          %v1749 = vmul.f32 %v1647, 1.442695
          %v1750 = vpow.pop %v1749
          %v1751 = vmul.f32 %v1648, 1.442695
          %v1752 = vpow.pop %v1751
          %v1753 = vmul.f32 %v1649, 1.442695
          %v1754 = vpow.pop %v1753
          %v1755 = vmul.f32 %v1650, 1.442695
          %v1756 = vpow.pop %v1755
          %v1757 = vmul.f32 %v1651, 1.442695
          %v1758 = vpow.pop %v1757
          %v1759 = vmul.f32 %v1652, 1.442695
          %v1760 = vpow.pop %v1759
          %v1761 = vmul.f32 %v1653, 1.442695
          %v1762 = vpow.pop %v1761
          %v1763 = vmul.f32 %v1654, 1.442695
          %v1764 = vpow.pop %v1763
          %v1765 = vmul.f32 %v1655, 1.442695
          %v1766 = vpow.pop %v1765
          %v1767 = vmul.f32 %v1656, 1.442695
          %v1768 = vpow.pop %v1767
          %v1769 = vmul.f32 %v1657, 1.442695
          %v1770 = vpow.pop %v1769
          %v1771 = vmul.f32 %v1658, 1.442695
          %v1772 = vpow.pop %v1771
          %v1773 = vmul.f32 %v1659, 1.442695
          %v1774 = vpow.pop %v1773
          %v1775 = vmul.f32 %v1660, 1.442695
          %v1776 = vpow.pop %v1775
          %v1777 = vmul.f32 %v1661, 1.442695
          %v1778 = vpow.pop %v1777
          %v1779 = vmul.f32 %v1662, 1.442695
          %v1780 = vpow.pop %v1779
          %v1781 = vmul.f32 %v1663, 1.442695
          %v1782 = vpow.pop %v1781
          %v1783 = vmul.f32 %v1664, 1.442695
          %v1784 = vpow.pop %v1783
          %v1785 = vmul.f32 %v1665, 1.442695
          %v1786 = vpow.pop %v1785
          %v1787 = vmul.f32 %v1666, 1.442695
          %v1788 = vpow.pop %v1787
          %v1789 = vmul.f32 %v1667, 1.442695
          %v1790 = vpow.pop %v1789
          %v1791 = vmul.f32 %v1668, 1.442695
          %v1792 = vpow.pop %v1791
          %v1793 = vmul.f32 %v1669, 1.442695
          %v1794 = vpow.pop %v1793
          %v1795 = vmul.f32 %v1670, 1.442695
          %v1796 = vpow.pop %v1795
          %v1797 = vmul.f32 %v1671, 1.442695
          %v1798 = vpow.pop %v1797
          %v1799 = vmul.f32 %v1672, 1.442695
          %v1800 = vpow.pop %v1799
          %v1801 = vpack.c.bf16 %v1678, %v1674
          %v1802 = vpack.c.bf16 %v1680, %v1676
          %v1803 = vpack.c.bf16 %v1686, %v1682
          %v1804 = vpack.c.bf16 %v1688, %v1684
          %v1805 = vpack.c.bf16 %v1694, %v1690
          %v1806 = vpack.c.bf16 %v1696, %v1692
          %v1807 = vpack.c.bf16 %v1702, %v1698
          %v1808 = vpack.c.bf16 %v1704, %v1700
          %v1809 = vpack.c.bf16 %v1710, %v1706
          %v1810 = vpack.c.bf16 %v1712, %v1708
          %v1811 = vpack.c.bf16 %v1718, %v1714
          %v1812 = vpack.c.bf16 %v1720, %v1716
          %v1813 = vpack.c.bf16 %v1726, %v1722
          %v1814 = vpack.c.bf16 %v1728, %v1724
          %v1815 = vpack.c.bf16 %v1734, %v1730
          %v1816 = vpack.c.bf16 %v1736, %v1732
          %v1817 = vpack.c.bf16 %v1742, %v1738
          %v1818 = vpack.c.bf16 %v1744, %v1740
          %v1819 = vpack.c.bf16 %v1750, %v1746
          %v1820 = vpack.c.bf16 %v1752, %v1748
          %v1821 = vpack.c.bf16 %v1758, %v1754
          %v1822 = vpack.c.bf16 %v1760, %v1756
          %v1823 = vpack.c.bf16 %v1766, %v1762
          %v1824 = vpack.c.bf16 %v1768, %v1764
          %v1825 = vpack.c.bf16 %v1774, %v1770
          %v1826 = vpack.c.bf16 %v1776, %v1772
          %v1827 = vpack.c.bf16 %v1782, %v1778
          %v1828 = vpack.c.bf16 %v1784, %v1780
          %v1829 = vpack.c.bf16 %v1790, %v1786
          %v1830 = vpack.c.bf16 %v1792, %v1788
          %v1831 = vpack.c.bf16 %v1798, %v1794
          %v1832 = vpack.c.bf16 %v1800, %v1796
          %1833 = vst [vmem:[#allocation2] sm:$0xff] %v1801
          %1834 = vst [vmem:[#allocation2 + $0x8] sm:$0xff] %v1802
          %1835 = vst [vmem:[#allocation2 + $0x10] sm:$0xff] %v1803
          %1836 = vst [vmem:[#allocation2 + $0x18] sm:$0xff] %v1804
          %1837 = vst [vmem:[#allocation2 + $0x20] sm:$0xff] %v1805
          %1838 = vst [vmem:[#allocation2 + $0x28] sm:$0xff] %v1806
          %1839 = vst [vmem:[#allocation2 + $0x30] sm:$0xff] %v1807
          %1840 = vst [vmem:[#allocation2 + $0x38] sm:$0xff] %v1808
          %1841 = vst [vmem:[#allocation2 + $0x40] sm:$0xff] %v1809
          %1842 = vst [vmem:[#allocation2 + $0x48] sm:$0xff] %v1810
          %1843 = vst [vmem:[#allocation2 + $0x50] sm:$0xff] %v1811
          %1844 = vst [vmem:[#allocation2 + $0x58] sm:$0xff] %v1812
          %1845 = vst [vmem:[#allocation2 + $0x60] sm:$0xff] %v1813
          %1846 = vst [vmem:[#allocation2 + $0x68] sm:$0xff] %v1814
          %1847 = vst [vmem:[#allocation2 + $0x70] sm:$0xff] %v1815
          %1848 = vst [vmem:[#allocation2 + $0x78] sm:$0xff] %v1816
          %1849 = vst [vmem:[#allocation2 + $0x80] sm:$0xff] %v1817
          %1850 = vst [vmem:[#allocation2 + $0x88] sm:$0xff] %v1818
          %1851 = vst [vmem:[#allocation2 + $0x90] sm:$0xff] %v1819
          %1852 = vst [vmem:[#allocation2 + $0x98] sm:$0xff] %v1820
          %1853 = vst [vmem:[#allocation2 + $0xa0] sm:$0xff] %v1821
          %1854 = vst [vmem:[#allocation2 + $0xa8] sm:$0xff] %v1822
          %1855 = vst [vmem:[#allocation2 + $0xb0] sm:$0xff] %v1823
          %1856 = vst [vmem:[#allocation2 + $0xb8] sm:$0xff] %v1824
          %1857 = vst [vmem:[#allocation2 + $0xc0] sm:$0xff] %v1825
          %1858 = vst [vmem:[#allocation2 + $0xc8] sm:$0xff] %v1826
          %1859 = vst [vmem:[#allocation2 + $0xd0] sm:$0xff] %v1827
          %1860 = vst [vmem:[#allocation2 + $0xd8] sm:$0xff] %v1828
          %1861 = vst [vmem:[#allocation2 + $0xe0] sm:$0xff] %v1829
          %1862 = vst [vmem:[#allocation2 + $0xe8] sm:$0xff] %v1830
          %1863 = vst [vmem:[#allocation2 + $0xf0] sm:$0xff] %v1831
          %1864 = vst [vmem:[#allocation2 + $0xf8] sm:$0xff] %v1832
          %v1865 = vadd.f32 %v1674, %v1678
          %v1866 = vadd.f32 %v1865, %v1682
          %v1867 = vadd.f32 %v1866, %v1686
          %v1868 = vadd.f32 %v1867, %v1690
          %v1869 = vadd.f32 %v1868, %v1694
          %v1870 = vadd.f32 %v1869, %v1698
          %v1871 = vadd.f32 %v1870, %v1702
          %v1872 = vadd.f32 %v1871, %v1706
          %v1873 = vadd.f32 %v1872, %v1710
          %v1874 = vadd.f32 %v1873, %v1714
          %v1875 = vadd.f32 %v1874, %v1718
          %v1876 = vadd.f32 %v1875, %v1722
          %v1877 = vadd.f32 %v1876, %v1726
          %v1878 = vadd.f32 %v1877, %v1730
          %v1879 = vadd.f32 %v1878, %v1734
          %v1880 = vadd.f32 %v1879, %v1738
          %v1881 = vadd.f32 %v1880, %v1742
          %v1882 = vadd.f32 %v1881, %v1746
          %v1883 = vadd.f32 %v1882, %v1750
          %v1884 = vadd.f32 %v1883, %v1754
          %v1885 = vadd.f32 %v1884, %v1758
          %v1886 = vadd.f32 %v1885, %v1762
          %v1887 = vadd.f32 %v1886, %v1766
          %v1888 = vadd.f32 %v1887, %v1770
          %v1889 = vadd.f32 %v1888, %v1774
          %v1890 = vadd.f32 %v1889, %v1778
          %v1891 = vadd.f32 %v1890, %v1782
          %v1892 = vadd.f32 %v1891, %v1786
          %v1893 = vadd.f32 %v1892, %v1790
          %v1894 = vadd.f32 %v1893, %v1794
          %v1895 = vadd.f32 %v1894, %v1798
          %v1896 = vrot.slane %v1895, 4
          %v1897 = vadd.f32 %v1895, %v1896
          %v1898 = vrot.slane %v1897, 2
          %v1899 = vadd.f32 %v1897, %v1898
          %v1900 = vrot.slane %v1899, 1
          %v1901 = vadd.f32 %v1899, %v1900
          %v1902 = vadd.f32 %v1676, %v1680
          %v1903 = vadd.f32 %v1902, %v1684
          %v1904 = vadd.f32 %v1903, %v1688
          %v1905 = vadd.f32 %v1904, %v1692
          %v1906 = vadd.f32 %v1905, %v1696
          %v1907 = vadd.f32 %v1906, %v1700
          %v1908 = vadd.f32 %v1907, %v1704
          %v1909 = vadd.f32 %v1908, %v1708
          %v1910 = vadd.f32 %v1909, %v1712
          %v1911 = vadd.f32 %v1910, %v1716
          %v1912 = vadd.f32 %v1911, %v1720
          %v1913 = vadd.f32 %v1912, %v1724
          %v1914 = vadd.f32 %v1913, %v1728
          %v1915 = vadd.f32 %v1914, %v1732
          %v1916 = vadd.f32 %v1915, %v1736
          %v1917 = vadd.f32 %v1916, %v1740
          %v1918 = vadd.f32 %v1917, %v1744
          %v1919 = vadd.f32 %v1918, %v1748
          %v1920 = vadd.f32 %v1919, %v1752
          %v1921 = vadd.f32 %v1920, %v1756
          %v1922 = vadd.f32 %v1921, %v1760
          %v1923 = vadd.f32 %v1922, %v1764
          %v1924 = vadd.f32 %v1923, %v1768
          %v1925 = vadd.f32 %v1924, %v1772
          %v1926 = vadd.f32 %v1925, %v1776
          %v1927 = vadd.f32 %v1926, %v1780
          %v1928 = vadd.f32 %v1927, %v1784
          %v1929 = vadd.f32 %v1928, %v1788
          %v1930 = vadd.f32 %v1929, %v1792
          %v1931 = vadd.f32 %v1930, %v1796
          %v1932 = vadd.f32 %v1931, %v1800
          %v1933 = vrot.slane %v1932, 4
          %v1934 = vadd.f32 %v1932, %v1933
          %v1935 = vrot.slane %v1934, 2
          %v1936 = vadd.f32 %v1934, %v1935
          %v1937 = vrot.slane %v1936, 1
          %v1938 = vadd.f32 %v1936, %v1937
          %v1939 = vadd.f32 %v1901, 0.0
          %v1940 = vadd.f32 %v1938, 0.0
          %v1943 = vcombine.low %v1939, %v1940
          %v1945 = vunpack.c.l.s4 1966171168
          %v1946 = vunpack.c.0.s8 %v1945
          %v1947 = vlaneseq
          %v1948 = vshrl.u32 %v1947, 7
          %v1949 = vsub.s32 %v1946, %v1948
          %v1950 = vrot.slane %v1943, %v1949
          %v1952 = vunpack.c.l.s4 1966171168
          %v1953 = vunpack.c.0.s8 %v1952
          %v1954 = vlaneseq
          %v1955 = vshrl.u32 %v1954, 7
          %v1956 = vsub.s32 %v1953, %v1955
          %v1957 = vrot.slane %v1950, %v1956
          %v1959 = vlaneseq
          %vm1960 = vcmp.ge.s32.totalorder %v1959, 0
          %vm1961 = vcmp.lt.s32.totalorder %v1959, 256
          %vm1962 = vmand %vm1960, %vm1961
          %1963 = vst.msk [vmem:[#allocation3] sm:$0x3] %vm1962, %v1957
          %v1964 = vld [vmem:[%s7] sm:$0xff]
          %1965 = vst [vmem:[#allocation7] sm:$0xff] %v1964
        $region60: #{tpu_custom_call.1} parent=51 // pred_fallthru
          _
        %s1966 = sld [smem:[#allocation4]]
        %s1967 = sld [smem:[#allocation4 + $0x1]]
        %v1968 = vld [vmem:[#allocation7] sm:$0xff]
        %v1970 = vcombine.high %v1968, %v1968
        %v1972 = vpack.c.bf16 %v1968, %v1968
        %v1973 = vpack.c.bf16 %v1970, %v1970
        %v1974 = vld [vmem:[#allocation2] sm:$0xff]
        %v1975 = vld [vmem:[#allocation2 + $0x8] sm:$0xff]
        %v1976 = vld [vmem:[#allocation2 + $0x10] sm:$0xff]
        %v1977 = vld [vmem:[#allocation2 + $0x18] sm:$0xff]
        %v1978 = vld [vmem:[#allocation2 + $0x20] sm:$0xff]
        %v1979 = vld [vmem:[#allocation2 + $0x28] sm:$0xff]
        %v1980 = vld [vmem:[#allocation2 + $0x30] sm:$0xff]
        %v1981 = vld [vmem:[#allocation2 + $0x38] sm:$0xff]
        %v1982 = vld [vmem:[#allocation2 + $0x40] sm:$0xff]
        %v1983 = vld [vmem:[#allocation2 + $0x48] sm:$0xff]
        %v1984 = vld [vmem:[#allocation2 + $0x50] sm:$0xff]
        %v1985 = vld [vmem:[#allocation2 + $0x58] sm:$0xff]
        %v1986 = vld [vmem:[#allocation2 + $0x60] sm:$0xff]
        %v1987 = vld [vmem:[#allocation2 + $0x68] sm:$0xff]
        %v1988 = vld [vmem:[#allocation2 + $0x70] sm:$0xff]
        %v1989 = vld [vmem:[#allocation2 + $0x78] sm:$0xff]
        %v1990 = vld [vmem:[#allocation2 + $0x80] sm:$0xff]
        %v1991 = vld [vmem:[#allocation2 + $0x88] sm:$0xff]
        %v1992 = vld [vmem:[#allocation2 + $0x90] sm:$0xff]
        %v1993 = vld [vmem:[#allocation2 + $0x98] sm:$0xff]
        %v1994 = vld [vmem:[#allocation2 + $0xa0] sm:$0xff]
        %v1995 = vld [vmem:[#allocation2 + $0xa8] sm:$0xff]
        %v1996 = vld [vmem:[#allocation2 + $0xb0] sm:$0xff]
        %v1997 = vld [vmem:[#allocation2 + $0xb8] sm:$0xff]
        %v1998 = vld [vmem:[#allocation2 + $0xc0] sm:$0xff]
        %v1999 = vld [vmem:[#allocation2 + $0xc8] sm:$0xff]
        %v2000 = vld [vmem:[#allocation2 + $0xd0] sm:$0xff]
        %v2001 = vld [vmem:[#allocation2 + $0xd8] sm:$0xff]
        %v2002 = vld [vmem:[#allocation2 + $0xe0] sm:$0xff]
        %v2003 = vld [vmem:[#allocation2 + $0xe8] sm:$0xff]
        %v2004 = vld [vmem:[#allocation2 + $0xf0] sm:$0xff]
        %v2005 = vld [vmem:[#allocation2 + $0xf8] sm:$0xff]
        %2006 = vmatprep.subr.bf16.mxu0 %v1975
        %2007 = vmatpush1.bf16.msra.mxu0 %v1974
        %2008 = vmatprep.subr.bf16.mxu0 %v1977
        %2009 = vmatpush1.bf16.msra.mxu0 %v1976
        %2010 = vmatprep.subr.bf16.mxu0 %v1979
        %2011 = vmatpush1.bf16.msra.mxu0 %v1978
        %2012 = vmatprep.subr.bf16.mxu0 %v1981
        %2013 = vmatpush1.bf16.msra.mxu0 %v1980
        %2014 = vmatprep.subr.bf16.mxu0 %v1983
        %2015 = vmatpush1.bf16.msra.mxu0 %v1982
        %2016 = vmatprep.subr.bf16.mxu0 %v1985
        %2017 = vmatpush1.bf16.msra.mxu0 %v1984
        %2018 = vmatprep.subr.bf16.mxu0 %v1987
        %2019 = vmatpush1.bf16.msra.mxu0 %v1986
        %2020 = vmatprep.subr.bf16.mxu0 %v1989
        %2021 = vmatpush1.bf16.msra.mxu0 %v1988
        %2022 = vmatprep.subr.bf16.mxu0 %v1991
        %2023 = vmatpush1.bf16.msra.mxu0 %v1990
        %2024 = vmatprep.subr.bf16.mxu0 %v1993
        %2025 = vmatpush1.bf16.msra.mxu0 %v1992
        %2026 = vmatprep.subr.bf16.mxu0 %v1995
        %2027 = vmatpush1.bf16.msra.mxu0 %v1994
        %2028 = vmatprep.subr.bf16.mxu0 %v1997
        %2029 = vmatpush1.bf16.msra.mxu0 %v1996
        %2030 = vmatprep.subr.bf16.mxu0 %v1999
        %2031 = vmatpush1.bf16.msra.mxu0 %v1998
        %2032 = vmatprep.subr.bf16.mxu0 %v2001
        %2033 = vmatpush1.bf16.msra.mxu0 %v2000
        %2034 = vmatprep.subr.bf16.mxu0 %v2003
        %2035 = vmatpush1.bf16.msra.mxu0 %v2002
        %2036 = vmatprep.subr.bf16.mxu0 %v2005
        %2037 = vmatpush1.bf16.msra.mxu0 %v2004
        %2038 = vmatprep.mubr.bf16.mxu0 %v1973
        %2039 = vmatmul.mubr.bf16.gmra.mrb[0].mxu0 %v1972
        %v2040 = vpop.f32.mrb[0].mxu0
        %v2041 = vadd.f32 0.0, %v2040
        %v2042 = vpop.f32.mrb[0].mxu0
        %v2043 = vadd.f32 0.0, %v2042
        %v2044 = vpop.f32.mrb[0].mxu0
        %v2045 = vpop.f32.mrb[0].mxu0
        %2046 = vdwg.mxu0
        %v2047 = vld [vmem:[%s5] sm:$0xff]
        %v2048 = vstv %s1966
        %v2049 = vmul.f32 %v2048, %v2041
        %v2050 = vmul.f32 %v2048, %v2043
        %v2053 = vcombine.low %v2049, %v2050
        %v2055 = vadd.f32 %v2047, %v2053
        %v2056 = vstv %s1967
        %v2057 = vadd.f32 %v2055, %v2056
        %vm2058 = vcmask 1043456
        %v2059 = vsel %vm2058, %v1968, 0.0
        %v2060 = vrot.slane %v2059, 4
        %v2061 = vadd.f32 %v2059, %v2060
        %v2062 = vrot.slane %v2061, 2
        %v2063 = vadd.f32 %v2061, %v2062
        %v2064 = vrot.slane %v2063, 1
        %v2065 = vadd.f32 %v2063, %v2064
        %v2066 = vsel %vm2058, %v1970, 0.0
        %v2067 = vrot.slane %v2066, 4
        %v2068 = vadd.f32 %v2066, %v2067
        %v2069 = vrot.slane %v2068, 2
        %v2070 = vadd.f32 %v2068, %v2069
        %v2071 = vrot.slane %v2070, 1
        %v2072 = vadd.f32 %v2070, %v2071
        %v2073 = vld [vmem:[%s6] sm:$0xf]
        %v2074 = vld [vmem:[#allocation3] sm:$0x3]
        %v2076 = vlaneseq
        %v2077 = vshrl.u32 %v2076, 7
        %v2078 = vsub.s32 0, %v2077
        %v2079 = vrot.slane %v2074, %v2078
        %v2080 = vlaneseq
        %v2081 = vshrl.u32 %v2080, 7
        %v2082 = vsub.s32 1, %v2081
        %v2083 = vrot.slane %v2074, %v2082
        %v2086 = vmul.f32 %v2079, %v1968
        %v2087 = vmul.f32 %v2083, %v1970
        %v2088 = vmul.f32 %v2048, %v2086
        %v2089 = vmul.f32 %v2048, %v2087
        %vm2090 = vcmask 31744
        %v2092 = vsel %vm2090, %v2073, 0
        %v2094 = vsel %vm2058, %v1968, 0
        %v2096 = vsel %vm2058, %v1970, 0
        %2098 = vmatprep.subr.mxu0 %v2096
        %2099 = vmatpush1.msra.mxu0 %v2094
        %2100 = vmatprep.subr.mxu0 0.0
        %2101 = vmatpush1.msra.mxu0 0.0
        %2102 = vmatprep.subr.mxu0 0.0
        %2103 = vmatpush1.msra.mxu0 0.0
        %2104 = vmatprep.subr.mxu0 0.0
        %2105 = vmatpush1.msra.mxu0 0.0
        %2106 = vmatprep.subr.mxu0 0.0
        %2107 = vmatpush1.msra.mxu0 0.0
        %2108 = vmatprep.subr.mxu0 0.0
        %2109 = vmatpush1.msra.mxu0 0.0
        %2110 = vmatprep.subr.mxu0 0.0
        %2111 = vmatpush1.msra.mxu0 0.0
        %2112 = vmatprep.subr.mxu0 0.0
        %2113 = vmatpush1.msra.mxu0 0.0
        %2114 = vmatprep.subr.mxu0 0.0
        %2115 = vmatpush1.msra.mxu0 0.0
        %2116 = vmatprep.subr.mxu0 0.0
        %2117 = vmatpush1.msra.mxu0 0.0
        %2118 = vmatprep.subr.mxu0 0.0
        %2119 = vmatpush1.msra.mxu0 0.0
        %2120 = vmatprep.subr.mxu0 0.0
        %2121 = vmatpush1.msra.mxu0 0.0
        %2122 = vmatprep.subr.mxu0 0.0
        %2123 = vmatpush1.msra.mxu0 0.0
        %2124 = vmatprep.subr.mxu0 0.0
        %2125 = vmatpush1.msra.mxu0 0.0
        %2126 = vmatprep.subr.mxu0 0.0
        %2127 = vmatpush1.msra.mxu0 0.0
        %2128 = vmatprep.subr.mxu0 0.0
        %2129 = vmatpush1.msra.mxu0 0.0
        %2130 = vmatprep.subr.mxu0 0.0
        %2131 = vmatpush1.msra.mxu0 0.0
        %2132 = vmatprep.subr.mxu0 0.0
        %2133 = vmatpush1.msra.mxu0 0.0
        %2134 = vmatprep.subr.mxu0 0.0
        %2135 = vmatpush1.msra.mxu0 0.0
        %2136 = vmatprep.subr.mxu0 0.0
        %2137 = vmatpush1.msra.mxu0 0.0
        %2138 = vmatprep.subr.mxu0 0.0
        %2139 = vmatpush1.msra.mxu0 0.0
        %2140 = vmatprep.subr.mxu0 0.0
        %2141 = vmatpush1.msra.mxu0 0.0
        %2142 = vmatprep.subr.mxu0 0.0
        %2143 = vmatpush1.msra.mxu0 0.0
        %2144 = vmatprep.subr.mxu0 0.0
        %2145 = vmatpush1.msra.mxu0 0.0
        %2146 = vmatprep.subr.mxu0 0.0
        %2147 = vmatpush1.msra.mxu0 0.0
        %2148 = vmatprep.subr.mxu0 0.0
        %2149 = vmatpush1.msra.mxu0 0.0
        %2150 = vmatprep.subr.mxu0 0.0
        %2151 = vmatpush1.msra.mxu0 0.0
        %2152 = vmatprep.subr.mxu0 0.0
        %2153 = vmatpush1.msra.mxu0 0.0
        %2154 = vmatprep.subr.mxu0 0.0
        %2155 = vmatpush1.msra.mxu0 0.0
        %2156 = vmatprep.subr.mxu0 0.0
        %2157 = vmatpush1.msra.mxu0 0.0
        %2158 = vmatprep.subr.mxu0 0.0
        %2159 = vmatpush1.msra.mxu0 0.0
        %2160 = vmatprep.subr.mxu0 0.0
        %2161 = vmatpush1.msra.mxu0 0.0
        %2162 = vmatprep.mubr.f32.mxu0 0.0
        %2163 = vmatmul.mubr.f32.gmra.mrb[0].mxu0 %v2092
        %v2164 = vpop.f32.mrb[0].mxu0
        %v2165 = vadd.f32 %v2088, %v2164
        %v2166 = vpop.f32.mrb[0].mxu0
        %v2167 = vadd.f32 %v2089, %v2166
        %2168 = vdwg.mxu0
        %v2169 = vmul.f32 %v2056, %v2065
        %v2170 = vmul.f32 %v2056, %v2072
        %v2171 = vadd.f32 %v2165, %v2169
        %v2172 = vadd.f32 %v2167, %v2170
        %v2173 = vadd.f32 %v2171, 1.1920929e-07
        %v2174 = vadd.f32 %v2172, 1.1920929e-07
        %v2177 = vcombine.low %v2173, %v2174
        %v2179 = vrcp.pop %v2177
        %v2180 = vmul.f32 %v2057, %v2179
        %v2181 = vmul.f32 %v1968, %v2180
        %vm2182 = vcmp.lt.f32.partialorder %v2181, 0.001
        %v2183 = vsel %vm2182, 0.0, %v2181
        %v2185 = vcombine.high %v2183, %v2183
        %v2187 = vsel %vm2058, %v2183, 0.0
        %v2188 = vrot.slane %v2187, 4
        %v2189 = vadd.f32 %v2187, %v2188
        %v2190 = vrot.slane %v2189, 2
        %v2191 = vadd.f32 %v2189, %v2190
        %v2192 = vrot.slane %v2191, 1
        %v2193 = vadd.f32 %v2191, %v2192
        %v2194 = vsel %vm2058, %v2185, 0.0
        %v2195 = vrot.slane %v2194, 4
        %v2196 = vadd.f32 %v2194, %v2195
        %v2197 = vrot.slane %v2196, 2
        %v2198 = vadd.f32 %v2196, %v2197
        %v2199 = vrot.slane %v2198, 1
        %v2200 = vadd.f32 %v2198, %v2199
        %v2203 = vcombine.low %v2193, %v2200
        %v2205 = vrcp.pop %v2203
        %v2206 = vmul.f32 %v2183, %v2205
        %2207 = vst [vmem:[#allocation7] sm:$0xff] %v2206
        // Predicated region
        $region61: #{tpu_custom_call.1} parent=51 // pred_check
          %p2208 = pneg %p202
        $region62: #{tpu_custom_call.1} parent=51 // pred_check_branch
          %2210 = sbr.rel (%p2208) target = $region64
        $region63: #{tpu_custom_call.1} parent=51 // pred_region
          %s2212 = ssub.s32 128, 128
          %2213 = vsyncadd [#allocation5], %s2212
          %s2215 = sshll.u32 [#allocation7], 4
          %s2216 = int_to_ptr.vmem [resolvable:$true] %s2215
          %2218 = dma.vmem_to_hbm [thread:$0]  %s2216, 128, %s8, [#allocation5]
        $region64: #{tpu_custom_call.1} parent=51 // pred_fallthru
          _
        // Predicated region
        $region65: #{tpu_custom_call.1} parent=51 // pred_check
          %p2219 = pneg %p202
        $region66: #{tpu_custom_call.1} parent=51 // pred_check_branch
          %2221 = sbr.rel (%p2219) target = $region68
        $region67: #{tpu_custom_call.1} parent=51 // pred_region
          %2222 = dma.done [#allocation5], 128
        $region68: #{tpu_custom_call.1} parent=51 // pred_fallthru
          _
      $region52: #{tpu_custom_call.1} parent=5 // pred_fallthru
        _
      %p2223 = scmp.le.s32.totalorder 2, %s16
      // Predicated region
      $region69: #{tpu_custom_call.1} parent=5 // pred_check
        %p2224 = pneg %p2223
      $region70: #{tpu_custom_call.1} parent=5 // pred_check_branch
        %2226 = sbr.rel (%p2224) target = $region72
      $region71: #{tpu_custom_call.1} parent=5 // pred_region
        %s2227 = ssub.s32 %s16, 2
      $region72: #{tpu_custom_call.1} parent=5 // pred_fallthru
        _
    $region6: #{tpu_custom_call.1} parent=1 // loop_footer
      %s20 = sadd.s32 1, %s16
    $region7: #{tpu_custom_call.1} parent=1 // loop_footer_branch
      %15 = sbr.rel target = $region3
    $region8: #{tpu_custom_call.1} parent=1 // loop_exit
      _
    %2228 = vsyncpa [#allocation5], 1
    %s2229 = scalar_lea.sflag [#allocation5], 1
    %2230 = vsyncpa %s2229, 1
    %2231 = vsyncpa [#allocation6], 1
    %s2232 = scalar_lea.sflag [#allocation6], 1
    %2233 = vsyncpa %s2232, 1

</llo_original>
